<compile_context>
chip_gen: v5e
topology: v5e:2x2
jax: 0.10.0
libtpu: 0.0.40
codegen_flags: <defaults>
</compile_context>

<pallas_src>
import jax
import jax.numpy as jnp
from jax.experimental import pallas as pl
from jax.experimental.pallas import tpu as pltpu


# ----------------------------------------------------------------------------
# Pallas kernels
# ----------------------------------------------------------------------------
def _conv_relu_pool_kernel(x_ref, w_ref, b_ref, o_ref):
    """conv (im2col matmul) + bias + ReLU + 2x2 maxpool.

    x_ref: (1, 4*N, K) bf16   -- 4 pool sub-positions stacked along rows
    w_ref: (K, Cout)   bf16
    b_ref: (1, Cout)   f32
    o_ref: (1, N, Cout) bf16
    """
    rows = x_ref.shape[1]
    n = rows // 4
    # One MXU push over all 4*N rows (f32 accumulate).
    y = jnp.dot(x_ref[0], w_ref[...], preferred_element_type=jnp.float32)
    # 2x2 maxpool = max over the 4 N-row slices (N is a multiple of 8).
    pooled = jnp.maximum(jnp.maximum(y[0:n], y[n:2 * n]),
                         jnp.maximum(y[2 * n:3 * n], y[3 * n:4 * n]))
    # Bias + ReLU hoisted after the max (exact: monotone ops, shared bias).
    pooled = jnp.maximum(pooled + b_ref[...], 0.0)
    o_ref[0] = pooled.astype(o_ref.dtype)


def _conv_gap_mlp_kernel(x_ref, w_ref, b_ref, w1_ref, b1_ref, w2_ref, b2_ref, o_ref):
    """conv2 (im2col matmul) + bias + ReLU + 2x2 maxpool + GAP + fc1 + ReLU + fc2.

    x_ref : (1, 4*N, K) bf16
    w_ref : (K, 32) bf16,  b_ref : (1, 32) f32
    w1_ref: (32, 512) bf16, b1_ref: (1, 512) f32
    w2_ref: (512, Cpad) bf16, b2_ref: (1, Cpad) f32   (Cpad = classes padded to 128)
    o_ref : (1, 1, Cpad) f32
    """
    rows = x_ref.shape[1]
    n = rows // 4
    y = jnp.dot(x_ref[0], w_ref[...], preferred_element_type=jnp.float32)
    pooled = jnp.maximum(jnp.maximum(y[0:n], y[n:2 * n]),
                         jnp.maximum(y[2 * n:3 * n], y[3 * n:4 * n]))
    pooled = jnp.maximum(pooled + b_ref[...], 0.0)               # (N, 32) f32
    feat = jnp.mean(pooled, axis=0, keepdims=True)               # GAP -> (1, 32)
    h = jnp.dot(feat.astype(w1_ref.dtype), w1_ref[...],
                preferred_element_type=jnp.float32) + b1_ref[...]
    h = jnp.maximum(h, 0.0)
    out = jnp.dot(h.astype(w2_ref.dtype), w2_ref[...],
                  preferred_element_type=jnp.float32) + b2_ref[...]
    o_ref[0] = out                                               # lane-dense (1, Cpad)


# ----------------------------------------------------------------------------
# pallas_call wrappers
# ----------------------------------------------------------------------------
def conv_relu_pool(patches, w, b):
    B, R, K = patches.shape           # R = 4 * N
    N = R // 4
    Cout = w.shape[1]
    return pl.pallas_call(
        _conv_relu_pool_kernel,
        out_shape=jax.ShapeDtypeStruct((B, N, Cout), jnp.bfloat16),
        grid=(B,),
        in_specs=[
            pl.BlockSpec((1, R, K), lambda bi: (bi, 0, 0)),
            pl.BlockSpec((K, Cout), lambda bi: (0, 0)),
            pl.BlockSpec((1, Cout), lambda bi: (0, 0)),
        ],
        out_specs=pl.BlockSpec((1, N, Cout), lambda bi: (bi, 0, 0)),
        compiler_params=pltpu.CompilerParams(dimension_semantics=("parallel",)),
    )(patches, w, b)


def conv_gap_mlp(patches, w, b, wfc1, bfc1, wfc2, bfc2):
    B, R, K = patches.shape
    Cout = w.shape[1]
    Hfc = wfc1.shape[1]
    Cpad = wfc2.shape[1]
    return pl.pallas_call(
        _conv_gap_mlp_kernel,
        out_shape=jax.ShapeDtypeStruct((B, 1, Cpad), jnp.float32),
        grid=(B,),
        in_specs=[
            pl.BlockSpec((1, R, K), lambda bi: (bi, 0, 0)),
            pl.BlockSpec((K, Cout), lambda bi: (0, 0)),
            pl.BlockSpec((1, Cout), lambda bi: (0, 0)),
            pl.BlockSpec((Cout, Hfc), lambda bi: (0, 0)),
            pl.BlockSpec((1, Hfc), lambda bi: (0, 0)),
            pl.BlockSpec((Hfc, Cpad), lambda bi: (0, 0)),
            pl.BlockSpec((1, Cpad), lambda bi: (0, 0)),
        ],
        out_specs=pl.BlockSpec((1, 1, Cpad), lambda bi: (bi, 0, 0)),
        compiler_params=pltpu.CompilerParams(dimension_semantics=("parallel",)),
    )(patches, w, b, wfc1, bfc1, wfc2, bfc2)


# ----------------------------------------------------------------------------
# JAX glue: im2col arranged so the 2x2 maxpool becomes a row-slice max in-kernel
# ----------------------------------------------------------------------------
def _im2col_pool_patches(x_nhwc):
    """[B, H, W, Cin] (H, W even) -> [B, 4*(H/2)*(W/2), 9*Cin]   (bf16 in, bf16 out).

    Rows [p*N, (p+1)*N), p = pr*2+pc, hold for each pooled output (i, j)
    (row i*(W/2)+j) the flattened 3x3xCin patch feeding conv output
    (2i+pr, 2j+pc) with padding=1.  Flat K index = (dy*3+dx)*Cin + cin,
    matching the HWIO weight flattening in init_params.
    """
    B, H, W, Cin = x_nhwc.shape
    Hp, Wp = H // 2, W // 2
    xp = jnp.pad(x_nhwc, ((0, 0), (1, 1), (1, 1), (0, 0)))
    slabs = []
    for pr in range(2):
        for pc in range(2):
            taps = []
            for dy in range(3):
                for dx in range(3):
                    taps.append(xp[:, pr + dy: pr + dy + H: 2,
                                   pc + dx: pc + dx + W: 2, :])   # [B, Hp, Wp, Cin]
            slabs.append(jnp.concatenate(taps, axis=-1).reshape(B, Hp * Wp, 9 * Cin))
    return jnp.concatenate(slabs, axis=1)                         # [B, 4*Hp*Wp, 9*Cin]


# ----------------------------------------------------------------------------
# Model forward
# ----------------------------------------------------------------------------
def cnn_forward(x_nchw, params):
    x = jnp.transpose(x_nchw, (0, 2, 3, 1)).astype(jnp.bfloat16)   # NCHW -> NHWC
    B, H, W, _ = x.shape
    assert H % 4 == 0 and W % 4 == 0 and ((H // 2) * (W // 2)) % 8 == 0, \
        "spatial size must be divisible by 4 (and H/2*W/2 by 8)"

    num_classes = params["wfc2"].shape[1]
    cpad = max(128, ((num_classes + 127) // 128) * 128)            # lane-dense FC output

    # bf16 matmul operands (f32 accumulation in-kernel); biases stay f32.
    w1 = params["w1"].astype(jnp.bfloat16)
    w2 = params["w2"].astype(jnp.bfloat16)
    wfc1 = params["wfc1"].astype(jnp.bfloat16)
    wfc2 = jnp.zeros((params["wfc2"].shape[0], cpad), jnp.bfloat16
                     ).at[:, :num_classes].set(params["wfc2"].astype(jnp.bfloat16))
    bfc2 = jnp.zeros((1, cpad), jnp.float32).at[:, :num_classes].set(params["bfc2"])

    # Stage 1: conv1 + ReLU + maxpool2x2 (one stacked MXU matmul per image).
    p1 = _im2col_pool_patches(x)                                   # (B, 4*N1, 27)
    h1 = conv_relu_pool(p1, w1, params["b1"])                      # (B, N1, 16) bf16
    h1 = h1.reshape(B, H // 2, W // 2, 16)

    # Stage 2: conv2 + ReLU + maxpool + GAP + fc1 + ReLU + fc2, fused in one call.
    p2 = _im2col_pool_patches(h1)                                  # (B, 4*N2, 144)
    out = conv_gap_mlp(p2, w2, params["b2"], wfc1, params["bfc1"], wfc2, bfc2)
    return out.reshape(B, cpad)[:, :num_classes]                   # (B, num_classes) f32


def init_params(key, num_classes):
    ks = jax.random.split(key, 4)
    # Conv weights created in HWIO (3,3,Cin,Cout) and flattened to (9*Cin, Cout),
    # matching the im2col tap ordering above.
    w1 = jax.random.normal(ks[0], (3, 3, 3, 16), jnp.float32) * 0.1
    w2 = jax.random.normal(ks[1], (3, 3, 16, 32), jnp.float32) * 0.1
    wfc1 = jax.random.normal(ks[2], (32, 512), jnp.float32) * 0.05
    wfc2 = jax.random.normal(ks[3], (512, num_classes), jnp.float32) * 0.05
    return {
        "w1": w1.reshape(9 * 3, 16), "b1": jnp.zeros((1, 16), jnp.float32),
        "w2": w2.reshape(9 * 16, 32), "b2": jnp.zeros((1, 32), jnp.float32),
        "wfc1": wfc1, "bfc1": jnp.zeros((1, 512), jnp.float32),
        "wfc2": wfc2, "bfc2": jnp.zeros((1, num_classes), jnp.float32),
    }


if __name__ == "__main__":
    num_classes = 8
    key = jax.random.PRNGKey(0)
    kx, kp = jax.random.split(key)
    x = jax.random.normal(kx, (2, 3, 16, 16), jnp.float32)   # small NCHW input
    params = init_params(kp, num_classes)

    out = jax.jit(cnn_forward)(x, params)
    jax.block_until_ready(out)
    assert out.shape == (2, num_classes)
    assert out.dtype == jnp.float32
    print("KERNEL_OK")
</pallas_src>

<mosaic_0001>
module attributes {stable_mosaic.version = 11 : i64} {
  func.func @_conv_relu_pool_kernel(%arg0: i32, %arg1: memref<1x256x27xbf16, #tpu.memory_space<vmem>>, %arg2: memref<27x16xbf16, #tpu.memory_space<vmem>>, %arg3: memref<1x16xf32, #tpu.memory_space<vmem>>, %arg4: memref<1x64x16xbf16, #tpu.memory_space<vmem>>) attributes {dimension_semantics = [#tpu.dimension_semantics<parallel>], iteration_bounds = array<i64: 2>, scalar_prefetch = 0 : i64, scratch_operands = 0 : i64, tpu.core_type = #tpu.core_type<tc>, window_params = [{transform_indices = @transform_0, window_bounds = array<i64: 1, 256, 27>}, {pipeline_mode = #tpu.pipeline_mode<synchronous>, transform_indices = @transform_1, window_bounds = array<i64: 27, 16>}, {pipeline_mode = #tpu.pipeline_mode<synchronous>, transform_indices = @transform_2, window_bounds = array<i64: 1, 16>}, {transform_indices = @transform_3, window_bounds = array<i64: 1, 64, 16>}]} {
    %c0 = arith.constant 0 : index
    %c0_0 = arith.constant 0 : index
    %c0_1 = arith.constant 0 : index
    %0 = vector.load %arg1[%c0, %c0_0, %c0_1] : memref<1x256x27xbf16, #tpu.memory_space<vmem>>, vector<1x256x27xbf16>
    %1 = vector.shape_cast %0 : vector<1x256x27xbf16> to vector<256x27xbf16>
    %c0_2 = arith.constant 0 : index
    %c0_3 = arith.constant 0 : index
    %2 = vector.load %arg2[%c0_2, %c0_3] : memref<27x16xbf16, #tpu.memory_space<vmem>>, vector<27x16xbf16>
    %cst = arith.constant dense<0.000000e+00> : vector<256x16xf32>
    %3 = tpu.matmul %1, %2, %cst {dimension_numbers = #tpu.dot_dimension_numbers<[1], [0], [0], [1], [0, 0, 1, 1], [], []>} : vector<256x27xbf16>, vector<27x16xbf16>, vector<256x16xf32> -> vector<256x16xf32>
    %4 = vector.extract_strided_slice %3 {offsets = [0, 0], sizes = [64, 16], strides = [1, 1]} : vector<256x16xf32> to vector<64x16xf32>
    %5 = vector.extract_strided_slice %3 {offsets = [64, 0], sizes = [64, 16], strides = [1, 1]} : vector<256x16xf32> to vector<64x16xf32>
    %6 = arith.maximumf %4, %5 : vector<64x16xf32>
    %7 = vector.extract_strided_slice %3 {offsets = [128, 0], sizes = [64, 16], strides = [1, 1]} : vector<256x16xf32> to vector<64x16xf32>
    %8 = vector.extract_strided_slice %3 {offsets = [192, 0], sizes = [64, 16], strides = [1, 1]} : vector<256x16xf32> to vector<64x16xf32>
    %9 = arith.maximumf %7, %8 : vector<64x16xf32>
    %10 = arith.maximumf %6, %9 : vector<64x16xf32>
    %c0_4 = arith.constant 0 : index
    %c0_5 = arith.constant 0 : index
    %11 = vector.load %arg3[%c0_4, %c0_5] : memref<1x16xf32, #tpu.memory_space<vmem>>, vector<1x16xf32>
    %12 = vector.broadcast %11 : vector<1x16xf32> to vector<64x16xf32>
    %13 = arith.addf %10, %12 : vector<64x16xf32>
    %cst_6 = arith.constant 0.000000e+00 : f32
    %14 = vector.broadcast %cst_6 : f32 to vector<64x16xf32>
    %15 = arith.maximumf %13, %14 : vector<64x16xf32>
    %16 = arith.truncf %15 : vector<64x16xf32> to vector<64x16xbf16>
    %c0_7 = arith.constant 0 : index
    %c0_8 = arith.constant 0 : index
    %c0_9 = arith.constant 0 : index
    %17 = vector.load %arg4[%c0_7, %c0_8, %c0_9] : memref<1x64x16xbf16, #tpu.memory_space<vmem>>, vector<1x64x16xbf16>
    %18 = vector.shape_cast %17 : vector<1x64x16xbf16> to vector<64x16xbf16>
    %19 = vector.shape_cast %16 : vector<64x16xbf16> to vector<1x64x16xbf16>
    tpu.vector_store %arg4[%c0_7, %c0_8, %c0_9], %19 {strides = array<i32>} : memref<1x64x16xbf16, #tpu.memory_space<vmem>>, vector<1x64x16xbf16>,
    return
  }
  func.func @transform_0(%arg0: i32) -> (i32, i32, i32) {
    %c0_i32 = arith.constant 0 : i32
    %c0_i32_0 = arith.constant 0 : i32
    %c0_i32_1 = arith.constant 0 : i32
    return %arg0, %c0_i32, %c0_i32_0 : i32, i32, i32
  }
  func.func @transform_1(%arg0: i32) -> (i32, i32) {
    %c0_i32 = arith.constant 0 : i32
    %c0_i32_0 = arith.constant 0 : i32
    %c0_i32_1 = arith.constant 0 : i32
    return %c0_i32, %c0_i32_0 : i32, i32
  }
  func.func @transform_2(%arg0: i32) -> (i32, i32) {
    %c0_i32 = arith.constant 0 : i32
    %c0_i32_0 = arith.constant 0 : i32
    %c0_i32_1 = arith.constant 0 : i32
    return %c0_i32, %c0_i32_0 : i32, i32
  }
  func.func @transform_3(%arg0: i32) -> (i32, i32, i32) {
    %c0_i32 = arith.constant 0 : i32
    %c0_i32_0 = arith.constant 0 : i32
    %c0_i32_1 = arith.constant 0 : i32
    return %arg0, %c0_i32, %c0_i32_0 : i32, i32, i32
  }
}

module attributes {stable_mosaic.version = 11 : i64} {
  func.func @_conv_gap_mlp_kernel(%arg0: i32, %arg1: memref<1x64x144xbf16, #tpu.memory_space<vmem>>, %arg2: memref<144x32xbf16, #tpu.memory_space<vmem>>, %arg3: memref<1x32xf32, #tpu.memory_space<vmem>>, %arg4: memref<32x512xbf16, #tpu.memory_space<vmem>>, %arg5: memref<1x512xf32, #tpu.memory_space<vmem>>, %arg6: memref<512x128xbf16, #tpu.memory_space<vmem>>, %arg7: memref<1x128xf32, #tpu.memory_space<vmem>>, %arg8: memref<1x1x128xf32, #tpu.memory_space<vmem>>) attributes {dimension_semantics = [#tpu.dimension_semantics<parallel>], iteration_bounds = array<i64: 2>, scalar_prefetch = 0 : i64, scratch_operands = 0 : i64, tpu.core_type = #tpu.core_type<tc>, window_params = [{transform_indices = @transform_0, window_bounds = array<i64: 1, 64, 144>}, {pipeline_mode = #tpu.pipeline_mode<synchronous>, transform_indices = @transform_1, window_bounds = array<i64: 144, 32>}, {pipeline_mode = #tpu.pipeline_mode<synchronous>, transform_indices = @transform_2, window_bounds = array<i64: 1, 32>}, {pipeline_mode = #tpu.pipeline_mode<synchronous>, transform_indices = @transform_3, window_bounds = array<i64: 32, 512>}, {pipeline_mode = #tpu.pipeline_mode<synchronous>, transform_indices = @transform_4, window_bounds = array<i64: 1, 512>}, {pipeline_mode = #tpu.pipeline_mode<synchronous>, transform_indices = @transform_5, window_bounds = array<i64: 512, 128>}, {pipeline_mode = #tpu.pipeline_mode<synchronous>, transform_indices = @transform_6, window_bounds = array<i64: 1, 128>}, {transform_indices = @transform_7, window_bounds = array<i64: 1, 1, 128>}]} {
    %c0 = arith.constant 0 : index
    %c0_0 = arith.constant 0 : index
    %c0_1 = arith.constant 0 : index
    %0 = vector.load %arg1[%c0, %c0_0, %c0_1] : memref<1x64x144xbf16, #tpu.memory_space<vmem>>, vector<1x64x144xbf16>
    %1 = vector.shape_cast %0 : vector<1x64x144xbf16> to vector<64x144xbf16>
    %c0_2 = arith.constant 0 : index
    %c0_3 = arith.constant 0 : index
    %2 = vector.load %arg2[%c0_2, %c0_3] : memref<144x32xbf16, #tpu.memory_space<vmem>>, vector<144x32xbf16>
    %cst = arith.constant dense<0.000000e+00> : vector<64x32xf32>
    %3 = tpu.matmul %1, %2, %cst {dimension_numbers = #tpu.dot_dimension_numbers<[1], [0], [0], [1], [0, 0, 1, 1], [], []>} : vector<64x144xbf16>, vector<144x32xbf16>, vector<64x32xf32> -> vector<64x32xf32>
    %4 = vector.extract_strided_slice %3 {offsets = [0, 0], sizes = [16, 32], strides = [1, 1]} : vector<64x32xf32> to vector<16x32xf32>
    %5 = vector.extract_strided_slice %3 {offsets = [16, 0], sizes = [16, 32], strides = [1, 1]} : vector<64x32xf32> to vector<16x32xf32>
    %6 = arith.maximumf %4, %5 : vector<16x32xf32>
    %7 = vector.extract_strided_slice %3 {offsets = [32, 0], sizes = [16, 32], strides = [1, 1]} : vector<64x32xf32> to vector<16x32xf32>
    %8 = vector.extract_strided_slice %3 {offsets = [48, 0], sizes = [16, 32], strides = [1, 1]} : vector<64x32xf32> to vector<16x32xf32>
    %9 = arith.maximumf %7, %8 : vector<16x32xf32>
    %10 = arith.maximumf %6, %9 : vector<16x32xf32>
    %c0_4 = arith.constant 0 : index
    %c0_5 = arith.constant 0 : index
    %11 = vector.load %arg3[%c0_4, %c0_5] : memref<1x32xf32, #tpu.memory_space<vmem>>, vector<1x32xf32>
    %12 = vector.broadcast %11 : vector<1x32xf32> to vector<16x32xf32>
    %13 = arith.addf %10, %12 : vector<16x32xf32>
    %cst_6 = arith.constant 0.000000e+00 : f32
    %14 = vector.broadcast %cst_6 : f32 to vector<16x32xf32>
    %15 = arith.maximumf %13, %14 : vector<16x32xf32>
    %cst_7 = arith.constant dense<0.000000e+00> : vector<32xf32>
    %16 = vector.multi_reduction <add>, %15, %cst_7 [0] : vector<16x32xf32> to vector<32xf32>
    %17 = vector.shape_cast %16 : vector<32xf32> to vector<1x32xf32>
    %cst_8 = arith.constant 1.600000e+01 : f32
    %18 = vector.broadcast %cst_8 : f32 to vector<1x32xf32>
    %19 = arith.divf %17, %18 : vector<1x32xf32>
    %20 = arith.truncf %19 : vector<1x32xf32> to vector<1x32xbf16>
    %c0_9 = arith.constant 0 : index
    %c0_10 = arith.constant 0 : index
    %21 = vector.load %arg4[%c0_9, %c0_10] : memref<32x512xbf16, #tpu.memory_space<vmem>>, vector<32x512xbf16>
    %cst_11 = arith.constant dense<0.000000e+00> : vector<1x512xf32>
    %22 = tpu.matmul %20, %21, %cst_11 {dimension_numbers = #tpu.dot_dimension_numbers<[1], [0], [0], [1], [0, 0, 1, 1], [], []>} : vector<1x32xbf16>, vector<32x512xbf16>, vector<1x512xf32> -> vector<1x512xf32>
    %c0_12 = arith.constant 0 : index
    %c0_13 = arith.constant 0 : index
    %23 = vector.load %arg5[%c0_12, %c0_13] : memref<1x512xf32, #tpu.memory_space<vmem>>, vector<1x512xf32>
    %24 = arith.addf %22, %23 : vector<1x512xf32>
    %cst_14 = arith.constant 0.000000e+00 : f32
    %25 = vector.broadcast %cst_14 : f32 to vector<1x512xf32>
    %26 = arith.maximumf %24, %25 : vector<1x512xf32>
    %27 = arith.truncf %26 : vector<1x512xf32> to vector<1x512xbf16>
    %c0_15 = arith.constant 0 : index
    %c0_16 = arith.constant 0 : index
    %28 = vector.load %arg6[%c0_15, %c0_16] : memref<512x128xbf16, #tpu.memory_space<vmem>>, vector<512x128xbf16>
    %cst_17 = arith.constant dense<0.000000e+00> : vector<1x128xf32>
    %29 = tpu.matmul %27, %28, %cst_17 {dimension_numbers = #tpu.dot_dimension_numbers<[1], [0], [0], [1], [0, 0, 1, 1], [], []>} : vector<1x512xbf16>, vector<512x128xbf16>, vector<1x128xf32> -> vector<1x128xf32>
    %c0_18 = arith.constant 0 : index
    %c0_19 = arith.constant 0 : index
    %30 = vector.load %arg7[%c0_18, %c0_19] : memref<1x128xf32, #tpu.memory_space<vmem>>, vector<1x128xf32>
    %31 = arith.addf %29, %30 : vector<1x128xf32>
    %c0_20 = arith.constant 0 : index
    %c0_21 = arith.constant 0 : index
    %c0_22 = arith.constant 0 : index
    %32 = vector.load %arg8[%c0_20, %c0_21, %c0_22] : memref<1x1x128xf32, #tpu.memory_space<vmem>>, vector<1x1x128xf32>
    %33 = vector.shape_cast %32 : vector<1x1x128xf32> to vector<1x128xf32>
    %34 = vector.shape_cast %31 : vector<1x128xf32> to vector<1x1x128xf32>
    tpu.vector_store %arg8[%c0_20, %c0_21, %c0_22], %34 {strides = array<i32>} : memref<1x1x128xf32, #tpu.memory_space<vmem>>, vector<1x1x128xf32>,
    return
  }
  func.func @transform_0(%arg0: i32) -> (i32, i32, i32) {
    %c0_i32 = arith.constant 0 : i32
    %c0_i32_0 = arith.constant 0 : i32
    %c0_i32_1 = arith.constant 0 : i32
    return %arg0, %c0_i32, %c0_i32_0 : i32, i32, i32
  }
  func.func @transform_1(%arg0: i32) -> (i32, i32) {
    %c0_i32 = arith.constant 0 : i32
    %c0_i32_0 = arith.constant 0 : i32
    %c0_i32_1 = arith.constant 0 : i32
    return %c0_i32, %c0_i32_0 : i32, i32
  }
  func.func @transform_2(%arg0: i32) -> (i32, i32) {
    %c0_i32 = arith.constant 0 : i32
    %c0_i32_0 = arith.constant 0 : i32
    %c0_i32_1 = arith.constant 0 : i32
    return %c0_i32, %c0_i32_0 : i32, i32
  }
  func.func @transform_3(%arg0: i32) -> (i32, i32) {
    %c0_i32 = arith.constant 0 : i32
    %c0_i32_0 = arith.constant 0 : i32
    %c0_i32_1 = arith.constant 0 : i32
    return %c0_i32, %c0_i32_0 : i32, i32
  }
  func.func @transform_4(%arg0: i32) -> (i32, i32) {
    %c0_i32 = arith.constant 0 : i32
    %c0_i32_0 = arith.constant 0 : i32
    %c0_i32_1 = arith.constant 0 : i32
    return %c0_i32, %c0_i32_0 : i32, i32
  }
  func.func @transform_5(%arg0: i32) -> (i32, i32) {
    %c0_i32 = arith.constant 0 : i32
    %c0_i32_0 = arith.constant 0 : i32
    %c0_i32_1 = arith.constant 0 : i32
    return %c0_i32, %c0_i32_0 : i32, i32
  }
  func.func @transform_6(%arg0: i32) -> (i32, i32) {
    %c0_i32 = arith.constant 0 : i32
    %c0_i32_0 = arith.constant 0 : i32
    %c0_i32_1 = arith.constant 0 : i32
    return %c0_i32, %c0_i32_0 : i32, i32
  }
  func.func @transform_7(%arg0: i32) -> (i32, i32, i32) {
    %c0_i32 = arith.constant 0 : i32
    %c0_i32_0 = arith.constant 0 : i32
    %c0_i32_1 = arith.constant 0 : i32
    return %arg0, %c0_i32, %c0_i32_0 : i32, i32, i32
  }
}

</mosaic_0001>

<llo_original>
// kernel: cnn_forward.2
$region0: #{cnn_forward.2}
  #allocation0 [shape = 'u32[]', space=smem, size = 0x4, offset = 0x4, fixed_abs, tag = 'smem constant byte address 0x4 - core index']
  #allocation1 [shape = 'u32[72,128]{1,0:T(1,128)}', space=vmem, size = 0x9000, scoped, tag = 'internal scratch']
  %s0 = inlined_call_operand.vmem [shape: bf16[2,256,27], index: 0, kind: input, shape index: {}]
  %s1 = inlined_call_operand.vmem [shape: bf16[27,16], index: 1, kind: input, shape index: {}]
  %s2 = inlined_call_operand.vmem [shape: f32[1,16], index: 2, kind: input, shape index: {}]
  %s3 = inlined_call_operand.vmem [shape: bf16[2,64,16], index: 3, kind: output, shape index: {}]
  %s4 = sld [smem:[#allocation0]]
  $region45: #{cnn_forward.2} parent=0
    _
  %s6 = ssub.s32 1, %s4
  %s7 = scalar_select 0, %s6, %s4
  loop: start=0, step=1, limit=4
  $region2: #{cnn_forward.2} parent=0 // loop_pre_header
    _
  $region3: #{cnn_forward.2} parent=0 // loop_header
    %s9 = sphi 0, %s13
    %p10 = scmp.ge.s32.totalorder %s9, 4
    %s19 = sphi 0, %s21
    %s22 = sphi 0, %s19
    %s23 = sphi 0, %s22
    %s39 = sphi 0, %s23
    %s43 = sphi 0, %s43
    %s45 = sphi 0, %s43
    %s46 = sphi 0, %s45
    %s60 = sphi 0, %s46
    %s64 = sphi 0, %s64
    %s66 = sphi 0, %s64
    %s67 = sphi 0, %s66
    %s81 = sphi 0, %s67
    %s87 = sphi 0, %s89
    %s90 = sphi 0, %s87
    %s91 = sphi 0, %s90
    %s107 = sphi 0, %s91
  $region4: #{cnn_forward.2} parent=0 // loop_header_branch
    %12 = sbr.rel (%p10) target = $region8
  $region5: #{cnn_forward.2} parent=0 // loop_body
    %s14 = ssub.s32 %s9, 1
    %s15 = ssub.s32 %s9, 2
    %s16 = sadd.s32 %s9, 1
    %s17 = ssub.s32 %s9, %s16
    %p18 = scmp.eq.s32.totalorder %s17, 0
    %s20 = sadd.s32 %s19, 1
    %s21 = scalar_select %p18, %s19, %s20
    %p24 = pneg %p18
    %p25 = scmp.eq.s32.totalorder %s9, 1
    %p26 = por %p24, %p25
    %p27 = scmp.ne.s32.totalorder %s19, %s22
    %p28 = scmp.eq.s32.totalorder %s9, 0
    %p29 = por %p27, %p28
    %p30 = scmp.ne.s32.totalorder %s19, %s22
    %p31 = scmp.eq.s32.totalorder %s14, 1
    %p32 = por %p30, %p31
    %p33 = scmp.ne.s32.totalorder %s22, %s23
    %p34 = scmp.eq.s32.totalorder %s14, 0
    %p35 = por %p33, %p34
    %p36 = scmp.ne.s32.totalorder %s22, %s23
    %p37 = scmp.eq.s32.totalorder %s15, 1
    %p38 = por %p36, %p37
    %p40 = scmp.ne.s32.totalorder %s23, %s39
    %p41 = scmp.eq.s32.totalorder %s15, 0
    %p42 = por %p40, %p41
    %s44 = sadd.s32 %s43, 1
    %p47 = scmp.eq.s32.totalorder %s9, 1
    %p48 = scmp.ne.s32.totalorder %s43, %s45
    %p49 = scmp.eq.s32.totalorder %s9, 0
    %p50 = por %p48, %p49
    %p51 = scmp.ne.s32.totalorder %s43, %s45
    %p52 = scmp.eq.s32.totalorder %s14, 1
    %p53 = por %p51, %p52
    %p54 = scmp.ne.s32.totalorder %s45, %s46
    %p55 = scmp.eq.s32.totalorder %s14, 0
    %p56 = por %p54, %p55
    %p57 = scmp.ne.s32.totalorder %s45, %s46
    %p58 = scmp.eq.s32.totalorder %s15, 1
    %p59 = por %p57, %p58
    %p61 = scmp.ne.s32.totalorder %s46, %s60
    %p62 = scmp.eq.s32.totalorder %s15, 0
    %p63 = por %p61, %p62
    %s65 = sadd.s32 %s64, 1
    %p68 = scmp.eq.s32.totalorder %s9, 1
    %p69 = scmp.ne.s32.totalorder %s64, %s66
    %p70 = scmp.eq.s32.totalorder %s9, 0
    %p71 = por %p69, %p70
    %p72 = scmp.ne.s32.totalorder %s64, %s66
    %p73 = scmp.eq.s32.totalorder %s14, 1
    %p74 = por %p72, %p73
    %p75 = scmp.ne.s32.totalorder %s66, %s67
    %p76 = scmp.eq.s32.totalorder %s14, 0
    %p77 = por %p75, %p76
    %p78 = scmp.ne.s32.totalorder %s66, %s67
    %p79 = scmp.eq.s32.totalorder %s15, 1
    %p80 = por %p78, %p79
    %p82 = scmp.ne.s32.totalorder %s67, %s81
    %p83 = scmp.eq.s32.totalorder %s15, 0
    %p84 = por %p82, %p83
    %s85 = ssub.s32 %s9, %s16
    %p86 = scmp.eq.s32.totalorder %s85, 0
    %s88 = sadd.s32 %s87, 1
    %s89 = scalar_select %p86, %s87, %s88
    %p92 = pneg %p86
    %p93 = scmp.eq.s32.totalorder %s9, 1
    %p94 = por %p92, %p93
    %p95 = scmp.ne.s32.totalorder %s87, %s90
    %p96 = scmp.eq.s32.totalorder %s9, 0
    %p97 = por %p95, %p96
    %p98 = scmp.ne.s32.totalorder %s87, %s90
    %p99 = scmp.eq.s32.totalorder %s14, 1
    %p100 = por %p98, %p99
    %p101 = scmp.ne.s32.totalorder %s90, %s91
    %p102 = scmp.eq.s32.totalorder %s14, 0
    %p103 = por %p101, %p102
    %p104 = scmp.ne.s32.totalorder %s90, %s91
    %p105 = scmp.eq.s32.totalorder %s15, 1
    %p106 = por %p104, %p105
    %p108 = scmp.ne.s32.totalorder %s91, %s107
    %p109 = scmp.eq.s32.totalorder %s15, 0
    %p110 = por %p108, %p109
    %p111 = scmp.le.s32.totalorder 1, %s9
    %p112 = scmp.lt.s32.totalorder %s9, 3
    %p113 = pnand %p111, %p112
    %p114 = pneg %p113
    // Predicated region
    $region9: #{cnn_forward.2} parent=5 // pred_check
      _
    $region10: #{cnn_forward.2} parent=5 // pred_check_branch
      %116 = sbr.rel (%p113) target = $region12
    $region11: #{cnn_forward.2} parent=5 // pred_region
      %s117 = ssub.s32 %s9, 1
      // Predicated region
      $region13: #{cnn_forward.2} parent=11 // pred_check
        %p118 = pneg %p56
      $region14: #{cnn_forward.2} parent=11 // pred_check_branch
        %120 = sbr.rel (%p118) target = $region16
      $region15: #{cnn_forward.2} parent=11 // pred_region
        _
      $region16: #{cnn_forward.2} parent=11 // pred_fallthru
        _
      // Predicated region
      $region17: #{cnn_forward.2} parent=11 // pred_check
        %p121 = pneg %p77
      $region18: #{cnn_forward.2} parent=11 // pred_check_branch
        %123 = sbr.rel (%p121) target = $region20
      $region19: #{cnn_forward.2} parent=11 // pred_region
        _
      $region20: #{cnn_forward.2} parent=11 // pred_fallthru
        _
    $region12: #{cnn_forward.2} parent=5 // pred_fallthru
      _
    %p124 = scmp.lt.s32.totalorder %s9, 2
    // Predicated region
    $region21: #{cnn_forward.2} parent=5 // pred_check
      %p125 = pneg %p124
    $region22: #{cnn_forward.2} parent=5 // pred_check_branch
      %127 = sbr.rel (%p125) target = $region24
    $region23: #{cnn_forward.2} parent=5 // pred_region
      // Predicated region
      $region25: #{cnn_forward.2} parent=23 // pred_check
        %p128 = pneg %p29
      $region26: #{cnn_forward.2} parent=23 // pred_check_branch
        %130 = sbr.rel (%p128) target = $region28
      $region27: #{cnn_forward.2} parent=23 // pred_region
        %p131 = scmp.lt.s32.totalorder %s9, 1
        %s132 = scalar_select %p131, %s9, 1
        %s133 = smul.addr %s132, 32
        %s134 = smul.addr %s133, 4
        %s135 = scalar_lea.vmem %s0, %s134
      $region28: #{cnn_forward.2} parent=23 // pred_fallthru
        _
    $region24: #{cnn_forward.2} parent=5 // pred_fallthru
      _
    %p136 = scmp.le.s32.totalorder 1, %s9
    %p137 = scmp.lt.s32.totalorder %s9, 3
    %p138 = pnand %p136, %p137
    %p139 = pneg %p138
    // Predicated region
    $region29: #{cnn_forward.2} parent=5 // pred_check
      _
    $region30: #{cnn_forward.2} parent=5 // pred_check_branch
      %141 = sbr.rel (%p138) target = $region32
    $region31: #{cnn_forward.2} parent=5 // pred_region
      %s142 = ssub.s32 %s9, 1
      %p143 = scmp.lt.s32.totalorder %s14, 1
      %s144 = scalar_select %p143, %s14, 1
      %s145 = smul.addr %s144, 32
      %s146 = smul.addr %s145, 4
      %s147 = scalar_lea.vmem %s0, %s146
      %p148 = pneg %p35
      %p149 = pneg %p32
      %p150 = pneg %p56
      %p151 = pneg %p53
      %p152 = pneg %p77
      %p153 = pneg %p74
      %p154 = pneg %p103
      %p155 = pneg %p100
      %p156 = scmp.lt.s32.totalorder %s14, 1
      %s157 = scalar_select %p156, %s14, 1
      %s158 = smul.addr %s157, 8
      %s159 = smul.addr %s158, 4
      %s160 = scalar_lea.vmem %s3, %s159
      %p161 = scmp.lt.s32.totalorder %s14, 1
      %s162 = scalar_select %p161, %s14, 1
      %s163 = smul.addr %s162, 32
      %s164 = smul.addr %s163, 4
      %s165 = scalar_lea.vmem %s0, %s164
      %p166 = scmp.lt.s32.totalorder %s14, 1
      %s167 = scalar_select %p166, %s14, 1
      %s168 = smul.addr %s167, 8
      %s169 = smul.addr %s168, 4
      %s170 = scalar_lea.vmem %s3, %s169
      %v172 = vld [vmem:[%s165] sm:$0xf]
      %v173 = vld [vmem:[%s165 + $0x4] sm:$0xf]
      %v174 = vld [vmem:[%s165 + $0x8] sm:$0xf]
      %v175 = vld [vmem:[%s165 + $0xc] sm:$0xf]
      %v176 = vld [vmem:[%s165 + $0x10] sm:$0xf]
      %v177 = vld [vmem:[%s165 + $0x14] sm:$0xf]
      %v178 = vld [vmem:[%s165 + $0x18] sm:$0xf]
      %v179 = vld [vmem:[%s165 + $0x1c] sm:$0xf]
      %v180 = vld [vmem:[%s165 + $0x20] sm:$0xf]
      %v181 = vld [vmem:[%s165 + $0x24] sm:$0xf]
      %v182 = vld [vmem:[%s165 + $0x28] sm:$0xf]
      %v183 = vld [vmem:[%s165 + $0x2c] sm:$0xf]
      %v184 = vld [vmem:[%s165 + $0x30] sm:$0xf]
      %v185 = vld [vmem:[%s165 + $0x34] sm:$0xf]
      %v186 = vld [vmem:[%s165 + $0x38] sm:$0xf]
      %v187 = vld [vmem:[%s165 + $0x3c] sm:$0xf]
      %v188 = vld [vmem:[%s165 + $0x40] sm:$0xf]
      %v189 = vld [vmem:[%s165 + $0x44] sm:$0xf]
      %v190 = vld [vmem:[%s165 + $0x48] sm:$0xf]
      %v191 = vld [vmem:[%s165 + $0x4c] sm:$0xf]
      %v192 = vld [vmem:[%s165 + $0x50] sm:$0xf]
      %v193 = vld [vmem:[%s165 + $0x54] sm:$0xf]
      %v194 = vld [vmem:[%s165 + $0x58] sm:$0xf]
      %v195 = vld [vmem:[%s165 + $0x5c] sm:$0xf]
      %v196 = vld [vmem:[%s165 + $0x60] sm:$0xf]
      %v197 = vld [vmem:[%s165 + $0x64] sm:$0xf]
      %v198 = vld [vmem:[%s165 + $0x68] sm:$0xf]
      %v199 = vld [vmem:[%s165 + $0x6c] sm:$0xf]
      %v200 = vld [vmem:[%s165 + $0x70] sm:$0xf]
      %v201 = vld [vmem:[%s165 + $0x74] sm:$0xf]
      %v202 = vld [vmem:[%s165 + $0x78] sm:$0xf]
      %v203 = vld [vmem:[%s165 + $0x7c] sm:$0xf]
      %v204 = vld [vmem:[%s1] sm:$0xf]
      %v205 = vld [vmem:[%s1 + $0x4] sm:$0xf]
      %v206 = vld [vmem:[%s1 + $0x8] sm:$0xf]
      %v207 = vld [vmem:[%s1 + $0xc] sm:$0x3]
      %v240 = vunpack.c.l.b16 %v172
      %v241 = vunpack.c.l.b16 %v173
      %v242 = vunpack.c.l.b16 %v174
      %v243 = vunpack.c.l.b16 %v175
      %v244 = vunpack.c.l.b16 %v176
      %v245 = vunpack.c.l.b16 %v177
      %v246 = vunpack.c.l.b16 %v178
      %v247 = vunpack.c.l.b16 %v179
      %v248 = vunpack.c.l.b16 %v180
      %v249 = vunpack.c.l.b16 %v181
      %v250 = vunpack.c.l.b16 %v182
      %v251 = vunpack.c.l.b16 %v183
      %v252 = vunpack.c.l.b16 %v184
      %v253 = vunpack.c.l.b16 %v185
      %v254 = vunpack.c.l.b16 %v186
      %v255 = vunpack.c.l.b16 %v187
      %v256 = vunpack.c.l.b16 %v188
      %v257 = vunpack.c.l.b16 %v189
      %v258 = vunpack.c.l.b16 %v190
      %v259 = vunpack.c.l.b16 %v191
      %v260 = vunpack.c.l.b16 %v192
      %v261 = vunpack.c.l.b16 %v193
      %v262 = vunpack.c.l.b16 %v194
      %v263 = vunpack.c.l.b16 %v195
      %v264 = vunpack.c.l.b16 %v196
      %v265 = vunpack.c.l.b16 %v197
      %v266 = vunpack.c.l.b16 %v198
      %v267 = vunpack.c.l.b16 %v199
      %v268 = vunpack.c.l.b16 %v200
      %v269 = vunpack.c.l.b16 %v201
      %v270 = vunpack.c.l.b16 %v202
      %v271 = vunpack.c.l.b16 %v203
      %v272 = vpack.c.b16 %v241, %v240
      %v273 = vpack.c.b16 %v243, %v242
      %v274 = vpack.c.b16 %v245, %v244
      %v275 = vpack.c.b16 %v247, %v246
      %v276 = vpack.c.b16 %v249, %v248
      %v277 = vpack.c.b16 %v251, %v250
      %v278 = vpack.c.b16 %v253, %v252
      %v279 = vpack.c.b16 %v255, %v254
      %v280 = vpack.c.b16 %v257, %v256
      %v281 = vpack.c.b16 %v259, %v258
      %v282 = vpack.c.b16 %v261, %v260
      %v283 = vpack.c.b16 %v263, %v262
      %v284 = vpack.c.b16 %v265, %v264
      %v285 = vpack.c.b16 %v267, %v266
      %v286 = vpack.c.b16 %v269, %v268
      %v287 = vpack.c.b16 %v271, %v270
      %v292 = vunpack.c.l.b16 %v204
      %v293 = vunpack.c.l.b16 %v205
      %v294 = vunpack.c.l.b16 %v206
      %v295 = vunpack.c.l.b16 %v207
      %v296 = vpack.c.b16 %v293, %v292
      %v297 = vpack.c.b16 %v295, %v294
      %vm299 = vcmask 220160
      %v301 = vsel %vm299, %v272, 0
      %v304 = vsel %vm299, %v273, 0
      %v307 = vsel %vm299, %v274, 0
      %v310 = vsel %vm299, %v275, 0
      %v313 = vsel %vm299, %v276, 0
      %v316 = vsel %vm299, %v277, 0
      %v319 = vsel %vm299, %v278, 0
      %v322 = vsel %vm299, %v279, 0
      %v325 = vsel %vm299, %v280, 0
      %v328 = vsel %vm299, %v281, 0
      %v331 = vsel %vm299, %v282, 0
      %v334 = vsel %vm299, %v283, 0
      %v337 = vsel %vm299, %v284, 0
      %v340 = vsel %vm299, %v285, 0
      %v343 = vsel %vm299, %v286, 0
      %v346 = vsel %vm299, %v287, 0
      %vm348 = vcmask 1044480
      %vm349 = vcmask 1045504
      %v350 = vsel %vm348, 4294967295, 65535
      %v351 = vsel %vm349, %v350, 0
      %v353 = vand.u32 %v297, %v351
      %355 = vmatpush.bf16.msra.mxu0 0
      %356 = vmatpush.bf16.msra.mxu0 0
      %357 = vmatpush.bf16.msra.mxu0 0
      %358 = vmatpush.bf16.msra.mxu0 0
      %359 = vmatpush.bf16.msra.mxu0 0
      %360 = vmatpush.bf16.msra.mxu0 0
      %361 = vmatpush.bf16.msra.mxu0 %v353
      %362 = vmatpush.bf16.msra.mxu0 %v296
      %363 = vmatmul.bf16.gmra.mxu0 %v301
      %v364 = vpop.f32.mrf.mxu0
      %v365 = vadd.f32 0.0, %v364
      %v366 = vpop.f32.mrf.mxu0
      %v367 = vadd.f32 0.0, %v366
      %368 = vmatmul.bf16.gmra.mxu0 %v304
      %v369 = vpop.f32.mrf.mxu0
      %v370 = vadd.f32 0.0, %v369
      %v371 = vpop.f32.mrf.mxu0
      %v372 = vadd.f32 0.0, %v371
      %373 = vmatmul.bf16.gmra.mxu0 %v307
      %v374 = vpop.f32.mrf.mxu0
      %v375 = vadd.f32 0.0, %v374
      %v376 = vpop.f32.mrf.mxu0
      %v377 = vadd.f32 0.0, %v376
      %378 = vmatmul.bf16.gmra.mxu0 %v310
      %v379 = vpop.f32.mrf.mxu0
      %v380 = vadd.f32 0.0, %v379
      %v381 = vpop.f32.mrf.mxu0
      %v382 = vadd.f32 0.0, %v381
      %383 = vmatmul.bf16.gmra.mxu0 %v313
      %v384 = vpop.f32.mrf.mxu0
      %v385 = vadd.f32 0.0, %v384
      %v386 = vpop.f32.mrf.mxu0
      %v387 = vadd.f32 0.0, %v386
      %388 = vmatmul.bf16.gmra.mxu0 %v316
      %v389 = vpop.f32.mrf.mxu0
      %v390 = vadd.f32 0.0, %v389
      %v391 = vpop.f32.mrf.mxu0
      %v392 = vadd.f32 0.0, %v391
      %393 = vmatmul.bf16.gmra.mxu0 %v319
      %v394 = vpop.f32.mrf.mxu0
      %v395 = vadd.f32 0.0, %v394
      %v396 = vpop.f32.mrf.mxu0
      %v397 = vadd.f32 0.0, %v396
      %398 = vmatmul.bf16.gmra.mxu0 %v322
      %v399 = vpop.f32.mrf.mxu0
      %v400 = vadd.f32 0.0, %v399
      %v401 = vpop.f32.mrf.mxu0
      %v402 = vadd.f32 0.0, %v401
      %403 = vmatmul.bf16.gmra.mxu0 %v325
      %v404 = vpop.f32.mrf.mxu0
      %v405 = vadd.f32 0.0, %v404
      %v406 = vpop.f32.mrf.mxu0
      %v407 = vadd.f32 0.0, %v406
      %408 = vmatmul.bf16.gmra.mxu0 %v328
      %v409 = vpop.f32.mrf.mxu0
      %v410 = vadd.f32 0.0, %v409
      %v411 = vpop.f32.mrf.mxu0
      %v412 = vadd.f32 0.0, %v411
      %413 = vmatmul.bf16.gmra.mxu0 %v331
      %v414 = vpop.f32.mrf.mxu0
      %v415 = vadd.f32 0.0, %v414
      %v416 = vpop.f32.mrf.mxu0
      %v417 = vadd.f32 0.0, %v416
      %418 = vmatmul.bf16.gmra.mxu0 %v334
      %v419 = vpop.f32.mrf.mxu0
      %v420 = vadd.f32 0.0, %v419
      %v421 = vpop.f32.mrf.mxu0
      %v422 = vadd.f32 0.0, %v421
      %423 = vmatmul.bf16.gmra.mxu0 %v337
      %v424 = vpop.f32.mrf.mxu0
      %v425 = vadd.f32 0.0, %v424
      %v426 = vpop.f32.mrf.mxu0
      %v427 = vadd.f32 0.0, %v426
      %428 = vmatmul.bf16.gmra.mxu0 %v340
      %v429 = vpop.f32.mrf.mxu0
      %v430 = vadd.f32 0.0, %v429
      %v431 = vpop.f32.mrf.mxu0
      %v432 = vadd.f32 0.0, %v431
      %433 = vmatmul.bf16.gmra.mxu0 %v343
      %v434 = vpop.f32.mrf.mxu0
      %v435 = vadd.f32 0.0, %v434
      %v436 = vpop.f32.mrf.mxu0
      %v437 = vadd.f32 0.0, %v436
      %438 = vmatmul.bf16.gmra.mxu0 %v346
      %v439 = vpop.f32.mrf.mxu0
      %v440 = vadd.f32 0.0, %v439
      %v441 = vpop.f32.mrf.mxu0
      %v442 = vadd.f32 0.0, %v441
      %443 = vdwg.mxu0
      %v444 = vmax.f32 %v365, %v385
      %v445 = vmax.f32 %v367, %v387
      %v446 = vmax.f32 %v370, %v390
      %v447 = vmax.f32 %v372, %v392
      %v448 = vmax.f32 %v375, %v395
      %v449 = vmax.f32 %v377, %v397
      %v450 = vmax.f32 %v380, %v400
      %v451 = vmax.f32 %v382, %v402
      %v452 = vmax.f32 %v405, %v425
      %v453 = vmax.f32 %v407, %v427
      %v454 = vmax.f32 %v410, %v430
      %v455 = vmax.f32 %v412, %v432
      %v456 = vmax.f32 %v415, %v435
      %v457 = vmax.f32 %v417, %v437
      %v458 = vmax.f32 %v420, %v440
      %v459 = vmax.f32 %v422, %v442
      %v460 = vmax.f32 %v444, %v452
      %v461 = vmax.f32 %v445, %v453
      %v462 = vmax.f32 %v446, %v454
      %v463 = vmax.f32 %v447, %v455
      %v464 = vmax.f32 %v448, %v456
      %v465 = vmax.f32 %v449, %v457
      %v466 = vmax.f32 %v450, %v458
      %v467 = vmax.f32 %v451, %v459
      %v468 = vld [vmem:[%s2] sm:$0x1]
      %v470 = vperm.slane %v468, 0
      %v472 = vadd.f32 %v460, %v470
      %v473 = vadd.f32 %v461, %v470
      %v474 = vadd.f32 %v462, %v470
      %v475 = vadd.f32 %v463, %v470
      %v476 = vadd.f32 %v464, %v470
      %v477 = vadd.f32 %v465, %v470
      %v478 = vadd.f32 %v466, %v470
      %v479 = vadd.f32 %v467, %v470
      %v480 = vmax.f32 %v472, 0.0
      %v481 = vmax.f32 %v473, 0.0
      %v482 = vmax.f32 %v474, 0.0
      %v483 = vmax.f32 %v475, 0.0
      %v484 = vmax.f32 %v476, 0.0
      %v485 = vmax.f32 %v477, 0.0
      %v486 = vmax.f32 %v478, 0.0
      %v487 = vmax.f32 %v479, 0.0
      %v488 = vpack.c.bf16 %v480, %v480
      %v489 = vpack.c.bf16 %v481, %v481
      %v490 = vpack.c.bf16 %v482, %v482
      %v491 = vpack.c.bf16 %v483, %v483
      %v492 = vpack.c.bf16 %v484, %v484
      %v493 = vpack.c.bf16 %v485, %v485
      %v494 = vpack.c.bf16 %v486, %v486
      %v495 = vpack.c.bf16 %v487, %v487
      %vm496 = vcmask 125952
      %497 = vst.msk [vmem:[%s170] sm:$0xf] %vm496, %v488
      %498 = vst.msk [vmem:[%s170 + $0x4] sm:$0xf] %vm496, %v489
      %499 = vst.msk [vmem:[%s170 + $0x8] sm:$0xf] %vm496, %v490
      %500 = vst.msk [vmem:[%s170 + $0xc] sm:$0xf] %vm496, %v491
      %501 = vst.msk [vmem:[%s170 + $0x10] sm:$0xf] %vm496, %v492
      %502 = vst.msk [vmem:[%s170 + $0x14] sm:$0xf] %vm496, %v493
      %503 = vst.msk [vmem:[%s170 + $0x18] sm:$0xf] %vm496, %v494
      %504 = vst.msk [vmem:[%s170 + $0x1c] sm:$0xf] %vm496, %v495
      %p505 = scmp.lt.s32.totalorder %s14, 1
      %s506 = scalar_select %p505, %s14, 1
      %s507 = smul.addr %s506, 8
      %s508 = smul.addr %s507, 4
      %s509 = scalar_lea.vmem %s3, %s508
      // Predicated region
      $region33: #{cnn_forward.2} parent=31 // pred_check
        %p510 = pneg %p100
      $region34: #{cnn_forward.2} parent=31 // pred_check_branch
        %512 = sbr.rel (%p510) target = $region36
      $region35: #{cnn_forward.2} parent=31 // pred_region
        _
      $region36: #{cnn_forward.2} parent=31 // pred_fallthru
        _
    $region32: #{cnn_forward.2} parent=5 // pred_fallthru
      _
    %p513 = scmp.le.s32.totalorder 2, %s9
    // Predicated region
    $region37: #{cnn_forward.2} parent=5 // pred_check
      %p514 = pneg %p513
    $region38: #{cnn_forward.2} parent=5 // pred_check_branch
      %516 = sbr.rel (%p514) target = $region40
    $region39: #{cnn_forward.2} parent=5 // pred_region
      %s517 = ssub.s32 %s9, 2
      // Predicated region
      $region41: #{cnn_forward.2} parent=39 // pred_check
        %p518 = pneg %p106
      $region42: #{cnn_forward.2} parent=39 // pred_check_branch
        %520 = sbr.rel (%p518) target = $region44
      $region43: #{cnn_forward.2} parent=39 // pred_region
        %p521 = scmp.lt.s32.totalorder %s15, 1
        %s522 = scalar_select %p521, %s15, 1
        %s523 = smul.addr %s522, 8
        %s524 = smul.addr %s523, 4
        %s525 = scalar_lea.vmem %s3, %s524
      $region44: #{cnn_forward.2} parent=39 // pred_fallthru
        _
    $region40: #{cnn_forward.2} parent=5 // pred_fallthru
      _
  $region6: #{cnn_forward.2} parent=0 // loop_footer
    %s13 = sadd.s32 1, %s9
  $region7: #{cnn_forward.2} parent=0 // loop_footer_branch
    %8 = sbr.rel target = $region3
  $region8: #{cnn_forward.2} parent=0 // loop_exit
    _

// kernel: cnn_forward.3
$region0: #{cnn_forward.3}
  #allocation0 [shape = 'u32[]', space=smem, size = 0x4, offset = 0x4, fixed_abs, tag = 'smem constant byte address 0x4 - core index']
  #allocation1 [shape = 'u32[72,128]{1,0:T(1,128)}', space=vmem, size = 0x9000, scoped, tag = 'internal scratch']
  %s0 = inlined_call_operand.vmem [shape: bf16[2,64,144], index: 0, kind: input, shape index: {}]
  %s1 = inlined_call_operand.vmem [shape: bf16[144,32], index: 1, kind: input, shape index: {}]
  %s2 = inlined_call_operand.vmem [shape: f32[1,32], index: 2, kind: input, shape index: {}]
  %s3 = inlined_call_operand.vmem [shape: bf16[32,512], index: 3, kind: input, shape index: {}]
  %s4 = inlined_call_operand.vmem [shape: f32[1,512], index: 4, kind: input, shape index: {}]
  %s5 = inlined_call_operand.vmem [shape: bf16[512,128], index: 5, kind: input, shape index: {}]
  %s6 = inlined_call_operand.vmem [shape: f32[1,128], index: 6, kind: input, shape index: {}]
  %s7 = inlined_call_operand.hbm [shape: f32[2,1,128], index: 7, kind: output, shape index: {}]
  %s8 = sld [smem:[#allocation0]]
  $region61: #{cnn_forward.3} parent=0
    _
  %s10 = ssub.s32 1, %s8
  %s11 = scalar_select 0, %s10, %s8
  $region1: #{cnn_forward.3} parent=0
    #allocation2 [shape = 'u8[1024]{0}', space=vmem, size = 0x400, scoped, tag = 'output window, operand 0']
    #allocation3 [shape = 's32[2]{0}', space=sflag, size = 0x8, scoped, tag = 'scoped memory for cnn_forward.3']
    %12 = vsyncpa [#allocation3], 0
    %s13 = scalar_lea.sflag [#allocation3], 1
    %14 = vsyncpa %s13, 0
    loop: start=0, step=1, limit=4
    $region2: #{cnn_forward.3} parent=1 // loop_pre_header
      _
    $region3: #{cnn_forward.3} parent=1 // loop_header
      %s16 = sphi 0, %s20
      %p17 = scmp.ge.s32.totalorder %s16, 4
      %s26 = sphi 0, %s28
      %s29 = sphi 0, %s26
      %s30 = sphi 0, %s29
      %s46 = sphi 0, %s30
      %s50 = sphi 0, %s50
      %s52 = sphi 0, %s50
      %s53 = sphi 0, %s52
      %s67 = sphi 0, %s53
      %s71 = sphi 0, %s71
      %s73 = sphi 0, %s71
      %s74 = sphi 0, %s73
      %s88 = sphi 0, %s74
      %s92 = sphi 0, %s92
      %s94 = sphi 0, %s92
      %s95 = sphi 0, %s94
      %s109 = sphi 0, %s95
      %s113 = sphi 0, %s113
      %s115 = sphi 0, %s113
      %s116 = sphi 0, %s115
      %s130 = sphi 0, %s116
      %s134 = sphi 0, %s134
      %s136 = sphi 0, %s134
      %s137 = sphi 0, %s136
      %s151 = sphi 0, %s137
      %s155 = sphi 0, %s155
      %s157 = sphi 0, %s155
      %s158 = sphi 0, %s157
      %s172 = sphi 0, %s158
      %s178 = sphi 0, %s180
      %s181 = sphi 0, %s178
      %s182 = sphi 0, %s181
      %s198 = sphi 0, %s182
    $region4: #{cnn_forward.3} parent=1 // loop_header_branch
      %19 = sbr.rel (%p17) target = $region8
    $region5: #{cnn_forward.3} parent=1 // loop_body
      %s21 = ssub.s32 %s16, 1
      %s22 = ssub.s32 %s16, 2
      %s23 = sadd.s32 %s16, 1
      %s24 = ssub.s32 %s16, %s23
      %p25 = scmp.eq.s32.totalorder %s24, 0
      %s27 = sadd.s32 %s26, 1
      %s28 = scalar_select %p25, %s26, %s27
      %p31 = pneg %p25
      %p32 = scmp.eq.s32.totalorder %s16, 1
      %p33 = por %p31, %p32
      %p34 = scmp.ne.s32.totalorder %s26, %s29
      %p35 = scmp.eq.s32.totalorder %s16, 0
      %p36 = por %p34, %p35
      %p37 = scmp.ne.s32.totalorder %s26, %s29
      %p38 = scmp.eq.s32.totalorder %s21, 1
      %p39 = por %p37, %p38
      %p40 = scmp.ne.s32.totalorder %s29, %s30
      %p41 = scmp.eq.s32.totalorder %s21, 0
      %p42 = por %p40, %p41
      %p43 = scmp.ne.s32.totalorder %s29, %s30
      %p44 = scmp.eq.s32.totalorder %s22, 1
      %p45 = por %p43, %p44
      %p47 = scmp.ne.s32.totalorder %s30, %s46
      %p48 = scmp.eq.s32.totalorder %s22, 0
      %p49 = por %p47, %p48
      %s51 = sadd.s32 %s50, 1
      %p54 = scmp.eq.s32.totalorder %s16, 1
      %p55 = scmp.ne.s32.totalorder %s50, %s52
      %p56 = scmp.eq.s32.totalorder %s16, 0
      %p57 = por %p55, %p56
      %p58 = scmp.ne.s32.totalorder %s50, %s52
      %p59 = scmp.eq.s32.totalorder %s21, 1
      %p60 = por %p58, %p59
      %p61 = scmp.ne.s32.totalorder %s52, %s53
      %p62 = scmp.eq.s32.totalorder %s21, 0
      %p63 = por %p61, %p62
      %p64 = scmp.ne.s32.totalorder %s52, %s53
      %p65 = scmp.eq.s32.totalorder %s22, 1
      %p66 = por %p64, %p65
      %p68 = scmp.ne.s32.totalorder %s53, %s67
      %p69 = scmp.eq.s32.totalorder %s22, 0
      %p70 = por %p68, %p69
      %s72 = sadd.s32 %s71, 1
      %p75 = scmp.eq.s32.totalorder %s16, 1
      %p76 = scmp.ne.s32.totalorder %s71, %s73
      %p77 = scmp.eq.s32.totalorder %s16, 0
      %p78 = por %p76, %p77
      %p79 = scmp.ne.s32.totalorder %s71, %s73
      %p80 = scmp.eq.s32.totalorder %s21, 1
      %p81 = por %p79, %p80
      %p82 = scmp.ne.s32.totalorder %s73, %s74
      %p83 = scmp.eq.s32.totalorder %s21, 0
      %p84 = por %p82, %p83
      %p85 = scmp.ne.s32.totalorder %s73, %s74
      %p86 = scmp.eq.s32.totalorder %s22, 1
      %p87 = por %p85, %p86
      %p89 = scmp.ne.s32.totalorder %s74, %s88
      %p90 = scmp.eq.s32.totalorder %s22, 0
      %p91 = por %p89, %p90
      %s93 = sadd.s32 %s92, 1
      %p96 = scmp.eq.s32.totalorder %s16, 1
      %p97 = scmp.ne.s32.totalorder %s92, %s94
      %p98 = scmp.eq.s32.totalorder %s16, 0
      %p99 = por %p97, %p98
      %p100 = scmp.ne.s32.totalorder %s92, %s94
      %p101 = scmp.eq.s32.totalorder %s21, 1
      %p102 = por %p100, %p101
      %p103 = scmp.ne.s32.totalorder %s94, %s95
      %p104 = scmp.eq.s32.totalorder %s21, 0
      %p105 = por %p103, %p104
      %p106 = scmp.ne.s32.totalorder %s94, %s95
      %p107 = scmp.eq.s32.totalorder %s22, 1
      %p108 = por %p106, %p107
      %p110 = scmp.ne.s32.totalorder %s95, %s109
      %p111 = scmp.eq.s32.totalorder %s22, 0
      %p112 = por %p110, %p111
      %s114 = sadd.s32 %s113, 1
      %p117 = scmp.eq.s32.totalorder %s16, 1
      %p118 = scmp.ne.s32.totalorder %s113, %s115
      %p119 = scmp.eq.s32.totalorder %s16, 0
      %p120 = por %p118, %p119
      %p121 = scmp.ne.s32.totalorder %s113, %s115
      %p122 = scmp.eq.s32.totalorder %s21, 1
      %p123 = por %p121, %p122
      %p124 = scmp.ne.s32.totalorder %s115, %s116
      %p125 = scmp.eq.s32.totalorder %s21, 0
      %p126 = por %p124, %p125
      %p127 = scmp.ne.s32.totalorder %s115, %s116
      %p128 = scmp.eq.s32.totalorder %s22, 1
      %p129 = por %p127, %p128
      %p131 = scmp.ne.s32.totalorder %s116, %s130
      %p132 = scmp.eq.s32.totalorder %s22, 0
      %p133 = por %p131, %p132
      %s135 = sadd.s32 %s134, 1
      %p138 = scmp.eq.s32.totalorder %s16, 1
      %p139 = scmp.ne.s32.totalorder %s134, %s136
      %p140 = scmp.eq.s32.totalorder %s16, 0
      %p141 = por %p139, %p140
      %p142 = scmp.ne.s32.totalorder %s134, %s136
      %p143 = scmp.eq.s32.totalorder %s21, 1
      %p144 = por %p142, %p143
      %p145 = scmp.ne.s32.totalorder %s136, %s137
      %p146 = scmp.eq.s32.totalorder %s21, 0
      %p147 = por %p145, %p146
      %p148 = scmp.ne.s32.totalorder %s136, %s137
      %p149 = scmp.eq.s32.totalorder %s22, 1
      %p150 = por %p148, %p149
      %p152 = scmp.ne.s32.totalorder %s137, %s151
      %p153 = scmp.eq.s32.totalorder %s22, 0
      %p154 = por %p152, %p153
      %s156 = sadd.s32 %s155, 1
      %p159 = scmp.eq.s32.totalorder %s16, 1
      %p160 = scmp.ne.s32.totalorder %s155, %s157
      %p161 = scmp.eq.s32.totalorder %s16, 0
      %p162 = por %p160, %p161
      %p163 = scmp.ne.s32.totalorder %s155, %s157
      %p164 = scmp.eq.s32.totalorder %s21, 1
      %p165 = por %p163, %p164
      %p166 = scmp.ne.s32.totalorder %s157, %s158
      %p167 = scmp.eq.s32.totalorder %s21, 0
      %p168 = por %p166, %p167
      %p169 = scmp.ne.s32.totalorder %s157, %s158
      %p170 = scmp.eq.s32.totalorder %s22, 1
      %p171 = por %p169, %p170
      %p173 = scmp.ne.s32.totalorder %s158, %s172
      %p174 = scmp.eq.s32.totalorder %s22, 0
      %p175 = por %p173, %p174
      %s176 = ssub.s32 %s16, %s23
      %p177 = scmp.eq.s32.totalorder %s176, 0
      %s179 = sadd.s32 %s178, 1
      %s180 = scalar_select %p177, %s178, %s179
      %p183 = pneg %p177
      %p184 = scmp.eq.s32.totalorder %s16, 1
      %p185 = por %p183, %p184
      %p186 = scmp.ne.s32.totalorder %s178, %s181
      %p187 = scmp.eq.s32.totalorder %s16, 0
      %p188 = por %p186, %p187
      %p189 = scmp.ne.s32.totalorder %s178, %s181
      %p190 = scmp.eq.s32.totalorder %s21, 1
      %p191 = por %p189, %p190
      %p192 = scmp.ne.s32.totalorder %s181, %s182
      %p193 = scmp.eq.s32.totalorder %s21, 0
      %p194 = por %p192, %p193
      %p195 = scmp.ne.s32.totalorder %s181, %s182
      %p196 = scmp.eq.s32.totalorder %s22, 1
      %p197 = por %p195, %p196
      %p199 = scmp.ne.s32.totalorder %s182, %s198
      %p200 = scmp.eq.s32.totalorder %s22, 0
      %p201 = por %p199, %p200
      %p202 = scmp.le.s32.totalorder 1, %s16
      %p203 = scmp.lt.s32.totalorder %s16, 3
      %p204 = pnand %p202, %p203
      %p205 = pneg %p204
      // Predicated region
      $region9: #{cnn_forward.3} parent=5 // pred_check
        _
      $region10: #{cnn_forward.3} parent=5 // pred_check_branch
        %207 = sbr.rel (%p204) target = $region12
      $region11: #{cnn_forward.3} parent=5 // pred_region
        %s208 = ssub.s32 %s16, 1
        // Predicated region
        $region13: #{cnn_forward.3} parent=11 // pred_check
          %p209 = pneg %p63
        $region14: #{cnn_forward.3} parent=11 // pred_check_branch
          %211 = sbr.rel (%p209) target = $region16
        $region15: #{cnn_forward.3} parent=11 // pred_region
          _
        $region16: #{cnn_forward.3} parent=11 // pred_fallthru
          _
        // Predicated region
        $region17: #{cnn_forward.3} parent=11 // pred_check
          %p212 = pneg %p84
        $region18: #{cnn_forward.3} parent=11 // pred_check_branch
          %214 = sbr.rel (%p212) target = $region20
        $region19: #{cnn_forward.3} parent=11 // pred_region
          _
        $region20: #{cnn_forward.3} parent=11 // pred_fallthru
          _
        // Predicated region
        $region21: #{cnn_forward.3} parent=11 // pred_check
          %p215 = pneg %p105
        $region22: #{cnn_forward.3} parent=11 // pred_check_branch
          %217 = sbr.rel (%p215) target = $region24
        $region23: #{cnn_forward.3} parent=11 // pred_region
          _
        $region24: #{cnn_forward.3} parent=11 // pred_fallthru
          _
        // Predicated region
        $region25: #{cnn_forward.3} parent=11 // pred_check
          %p218 = pneg %p126
        $region26: #{cnn_forward.3} parent=11 // pred_check_branch
          %220 = sbr.rel (%p218) target = $region28
        $region27: #{cnn_forward.3} parent=11 // pred_region
          _
        $region28: #{cnn_forward.3} parent=11 // pred_fallthru
          _
        // Predicated region
        $region29: #{cnn_forward.3} parent=11 // pred_check
          %p221 = pneg %p147
        $region30: #{cnn_forward.3} parent=11 // pred_check_branch
          %223 = sbr.rel (%p221) target = $region32
        $region31: #{cnn_forward.3} parent=11 // pred_region
          _
        $region32: #{cnn_forward.3} parent=11 // pred_fallthru
          _
        // Predicated region
        $region33: #{cnn_forward.3} parent=11 // pred_check
          %p224 = pneg %p168
        $region34: #{cnn_forward.3} parent=11 // pred_check_branch
          %226 = sbr.rel (%p224) target = $region36
        $region35: #{cnn_forward.3} parent=11 // pred_region
          _
        $region36: #{cnn_forward.3} parent=11 // pred_fallthru
          _
      $region12: #{cnn_forward.3} parent=5 // pred_fallthru
        _
      %p227 = scmp.lt.s32.totalorder %s16, 2
      // Predicated region
      $region37: #{cnn_forward.3} parent=5 // pred_check
        %p228 = pneg %p227
      $region38: #{cnn_forward.3} parent=5 // pred_check_branch
        %230 = sbr.rel (%p228) target = $region40
      $region39: #{cnn_forward.3} parent=5 // pred_region
        // Predicated region
        $region41: #{cnn_forward.3} parent=39 // pred_check
          %p231 = pneg %p36
        $region42: #{cnn_forward.3} parent=39 // pred_check_branch
          %233 = sbr.rel (%p231) target = $region44
        $region43: #{cnn_forward.3} parent=39 // pred_region
          %p234 = scmp.lt.s32.totalorder %s16, 1
          %s235 = scalar_select %p234, %s16, 1
          %s236 = smul.addr %s235, 16
          %s237 = smul.addr %s236, 4
          %s238 = scalar_lea.vmem %s0, %s237
        $region44: #{cnn_forward.3} parent=39 // pred_fallthru
          _
      $region40: #{cnn_forward.3} parent=5 // pred_fallthru
        _
      %p239 = scmp.le.s32.totalorder 1, %s16
      %p240 = scmp.lt.s32.totalorder %s16, 3
      %p241 = pnand %p239, %p240
      %p242 = pneg %p241
      // Predicated region
      $region45: #{cnn_forward.3} parent=5 // pred_check
        _
      $region46: #{cnn_forward.3} parent=5 // pred_check_branch
        %244 = sbr.rel (%p241) target = $region48
      $region47: #{cnn_forward.3} parent=5 // pred_region
        %s245 = ssub.s32 %s16, 1
        %p246 = scmp.lt.s32.totalorder %s21, 1
        %s247 = scalar_select %p246, %s21, 1
        %s248 = smul.addr %s247, 16
        %s249 = smul.addr %s248, 4
        %s250 = scalar_lea.vmem %s0, %s249
        %p251 = pneg %p42
        %p252 = pneg %p39
        %p253 = pneg %p63
        %p254 = pneg %p60
        %p255 = pneg %p84
        %p256 = pneg %p81
        %p257 = pneg %p105
        %p258 = pneg %p102
        %p259 = pneg %p126
        %p260 = pneg %p123
        %p261 = pneg %p147
        %p262 = pneg %p144
        %p263 = pneg %p168
        %p264 = pneg %p165
        %p265 = pneg %p194
        %p266 = pneg %p191
        %s267 = sand.u32 %s181, 1
        %s268 = scalar_lea.sflag [#allocation3], %s267
        %s269 = sand.u32 %s181, 1
        %s270 = scalar_lea.vmem [#allocation2], %s269
        %p271 = scmp.lt.s32.totalorder %s21, 1
        %s272 = scalar_select %p271, %s21, 1
        %s273 = smul.addr %s272, 16
        %s274 = smul.addr %s273, 4
        %s275 = scalar_lea.vmem %s0, %s274
        %v277 = vld [vmem:[%s275] sm:$0xff]
        %v278 = vld [vmem:[%s275 + $0x8] sm:$0xff]
        %v279 = vld [vmem:[%s275 + $0x10] sm:$0xff]
        %v280 = vld [vmem:[%s275 + $0x18] sm:$0xff]
        %v281 = vld [vmem:[%s275 + $0x20] sm:$0xff]
        %v282 = vld [vmem:[%s275 + $0x28] sm:$0xff]
        %v283 = vld [vmem:[%s275 + $0x30] sm:$0xff]
        %v284 = vld [vmem:[%s275 + $0x38] sm:$0xff]
        %v285 = vld [vmem:[%s1] sm:$0xf]
        %v286 = vld [vmem:[%s1 + $0x4] sm:$0xf]
        %v287 = vld [vmem:[%s1 + $0x8] sm:$0xf]
        %v288 = vld [vmem:[%s1 + $0xc] sm:$0xf]
        %v289 = vld [vmem:[%s1 + $0x10] sm:$0xf]
        %v290 = vld [vmem:[%s1 + $0x14] sm:$0xf]
        %v291 = vld [vmem:[%s1 + $0x18] sm:$0xf]
        %v292 = vld [vmem:[%s1 + $0x1c] sm:$0xf]
        %v293 = vld [vmem:[%s1 + $0x20] sm:$0xf]
        %v294 = vld [vmem:[%s1 + $0x24] sm:$0xf]
        %v295 = vld [vmem:[%s1 + $0x28] sm:$0xf]
        %v296 = vld [vmem:[%s1 + $0x2c] sm:$0xf]
        %v297 = vld [vmem:[%s1 + $0x30] sm:$0xf]
        %v298 = vld [vmem:[%s1 + $0x34] sm:$0xf]
        %v299 = vld [vmem:[%s1 + $0x38] sm:$0xf]
        %v300 = vld [vmem:[%s1 + $0x3c] sm:$0xf]
        %v301 = vld [vmem:[%s1 + $0x40] sm:$0xf]
        %v302 = vld [vmem:[%s1 + $0x44] sm:$0xf]
        %v311 = vunpack.c.l.b16 %v277
        %v312 = vunpack.c.h.b16 %v277
        %v313 = vunpack.c.l.b16 %v278
        %v314 = vunpack.c.h.b16 %v278
        %v315 = vunpack.c.l.b16 %v279
        %v316 = vunpack.c.h.b16 %v279
        %v317 = vunpack.c.l.b16 %v280
        %v318 = vunpack.c.h.b16 %v280
        %v319 = vunpack.c.l.b16 %v281
        %v320 = vunpack.c.h.b16 %v281
        %v321 = vunpack.c.l.b16 %v282
        %v322 = vunpack.c.h.b16 %v282
        %v323 = vunpack.c.l.b16 %v283
        %v324 = vunpack.c.h.b16 %v283
        %v325 = vunpack.c.l.b16 %v284
        %v326 = vunpack.c.h.b16 %v284
        %v327 = vpack.c.b16 %v313, %v311
        %v328 = vpack.c.b16 %v314, %v312
        %v329 = vpack.c.b16 %v317, %v315
        %v330 = vpack.c.b16 %v318, %v316
        %v331 = vpack.c.b16 %v321, %v319
        %v332 = vpack.c.b16 %v322, %v320
        %v333 = vpack.c.b16 %v325, %v323
        %v334 = vpack.c.b16 %v326, %v324
        %v357 = vunpack.c.l.b16 %v285
        %v358 = vunpack.c.l.b16 %v286
        %v359 = vunpack.c.l.b16 %v287
        %v360 = vunpack.c.l.b16 %v288
        %v361 = vunpack.c.l.b16 %v289
        %v362 = vunpack.c.l.b16 %v290
        %v363 = vunpack.c.l.b16 %v291
        %v364 = vunpack.c.l.b16 %v292
        %v365 = vunpack.c.l.b16 %v293
        %v366 = vunpack.c.l.b16 %v294
        %v367 = vunpack.c.l.b16 %v295
        %v368 = vunpack.c.l.b16 %v296
        %v369 = vunpack.c.l.b16 %v297
        %v370 = vunpack.c.l.b16 %v298
        %v371 = vunpack.c.l.b16 %v299
        %v372 = vunpack.c.l.b16 %v300
        %v373 = vunpack.c.l.b16 %v301
        %v374 = vunpack.c.l.b16 %v302
        %v375 = vpack.c.b16 %v358, %v357
        %v376 = vpack.c.b16 %v360, %v359
        %v377 = vpack.c.b16 %v362, %v361
        %v378 = vpack.c.b16 %v364, %v363
        %v379 = vpack.c.b16 %v366, %v365
        %v380 = vpack.c.b16 %v368, %v367
        %v381 = vpack.c.b16 %v370, %v369
        %v382 = vpack.c.b16 %v372, %v371
        %v383 = vpack.c.b16 %v374, %v373
        %vm393 = vcmask 130048
        %v395 = vsel %vm393, %v328, 0
        %v398 = vsel %vm393, %v330, 0
        %v401 = vsel %vm393, %v332, 0
        %v404 = vsel %vm393, %v334, 0
        %406 = vmatpush.bf16.msra.mxu0 %v382
        %407 = vmatpush.bf16.msra.mxu0 %v381
        %408 = vmatpush.bf16.msra.mxu0 %v380
        %409 = vmatpush.bf16.msra.mxu0 %v379
        %410 = vmatpush.bf16.msra.mxu0 %v378
        %411 = vmatpush.bf16.msra.mxu0 %v377
        %412 = vmatpush.bf16.msra.mxu0 %v376
        %413 = vmatpush.bf16.msra.mxu0 %v375
        %414 = vmatmul.bf16.gmra.mxu0 %v327
        %v415 = vpop.f32.mrf.mxu0
        %v416 = vadd.f32 0.0, %v415
        %v417 = vpop.f32.mrf.mxu0
        %v418 = vadd.f32 0.0, %v417
        %419 = vmatmul.bf16.gmra.mxu0 %v329
        %v420 = vpop.f32.mrf.mxu0
        %v421 = vadd.f32 0.0, %v420
        %v422 = vpop.f32.mrf.mxu0
        %v423 = vadd.f32 0.0, %v422
        %424 = vmatmul.bf16.gmra.mxu0 %v331
        %v425 = vpop.f32.mrf.mxu0
        %v426 = vadd.f32 0.0, %v425
        %v427 = vpop.f32.mrf.mxu0
        %v428 = vadd.f32 0.0, %v427
        %429 = vmatmul.bf16.gmra.mxu0 %v333
        %v430 = vpop.f32.mrf.mxu0
        %v431 = vadd.f32 0.0, %v430
        %v432 = vpop.f32.mrf.mxu0
        %v433 = vadd.f32 0.0, %v432
        %434 = vdwg.mxu0
        %435 = vmatpush.bf16.msra.mxu0 0
        %436 = vmatpush.bf16.msra.mxu0 0
        %437 = vmatpush.bf16.msra.mxu0 0
        %438 = vmatpush.bf16.msra.mxu0 0
        %439 = vmatpush.bf16.msra.mxu0 0
        %440 = vmatpush.bf16.msra.mxu0 0
        %441 = vmatpush.bf16.msra.mxu0 0
        %442 = vmatpush.bf16.msra.mxu0 %v383
        %443 = vmatmul.bf16.gmra.mxu0 %v395
        %v444 = vpop.f32.mrf.mxu0
        %v445 = vadd.f32 %v416, %v444
        %v446 = vpop.f32.mrf.mxu0
        %v447 = vadd.f32 %v418, %v446
        %448 = vmatmul.bf16.gmra.mxu0 %v398
        %v449 = vpop.f32.mrf.mxu0
        %v450 = vadd.f32 %v421, %v449
        %v451 = vpop.f32.mrf.mxu0
        %v452 = vadd.f32 %v423, %v451
        %453 = vmatmul.bf16.gmra.mxu0 %v401
        %v454 = vpop.f32.mrf.mxu0
        %v455 = vadd.f32 %v426, %v454
        %v456 = vpop.f32.mrf.mxu0
        %v457 = vadd.f32 %v428, %v456
        %458 = vmatmul.bf16.gmra.mxu0 %v404
        %v459 = vpop.f32.mrf.mxu0
        %v460 = vadd.f32 %v431, %v459
        %v461 = vpop.f32.mrf.mxu0
        %v462 = vadd.f32 %v433, %v461
        %463 = vdwg.mxu0
        %v464 = vmax.f32 %v445, %v450
        %v465 = vmax.f32 %v447, %v452
        %v466 = vmax.f32 %v455, %v460
        %v467 = vmax.f32 %v457, %v462
        %v468 = vmax.f32 %v464, %v466
        %v469 = vmax.f32 %v465, %v467
        %v470 = vld [vmem:[%s2] sm:$0x1]
        %v472 = vperm.slane %v470, 0
        %v474 = vadd.f32 %v468, %v472
        %v475 = vadd.f32 %v469, %v472
        %v476 = vmax.f32 %v474, 0.0
        %v477 = vmax.f32 %v475, 0.0
        %vm478 = vcmask 261120
        %v479 = vsel %vm478, %v476, 0.0
        %v480 = vsel %vm478, %v477, 0.0
        %v481 = vadd.f32 %v479, %v480
        %v482 = vrot.slane %v481, 4
        %v483 = vadd.f32 %v481, %v482
        %v484 = vrot.slane %v483, 2
        %v485 = vadd.f32 %v483, %v484
        %v486 = vrot.slane %v485, 1
        %v487 = vadd.f32 %v485, %v486
        %v488 = vrcp.pop 16.0
        %v489 = vmul.f32 16.0, %v488
        %v490 = vsub.f32 1.0, %v489
        %v491 = vmul.f32 %v488, %v490
        %v492 = vadd.f32 %v488, %v491
        %vm493 = vweird.f32 %v488
        %v494 = vsel %vm493, %v488, %v492
        %v495 = vmul.f32 %v487, %v494
        %v496 = vpack.c.bf16 %v495, %v495
        %v497 = vld [vmem:[%s3] sm:$0xff]
        %v498 = vld [vmem:[%s3 + $0x8] sm:$0xff]
        %v499 = vld [vmem:[%s3 + $0x10] sm:$0xff]
        %v500 = vld [vmem:[%s3 + $0x18] sm:$0xff]
        %v501 = vld [vmem:[%s3 + $0x20] sm:$0xff]
        %v502 = vld [vmem:[%s3 + $0x28] sm:$0xff]
        %v503 = vld [vmem:[%s3 + $0x30] sm:$0xff]
        %v504 = vld [vmem:[%s3 + $0x38] sm:$0xff]
        %v505 = vld [vmem:[%s4] sm:$0xf]
        %v514 = vunpack.c.l.b16 %v497
        %v515 = vunpack.c.h.b16 %v497
        %v516 = vunpack.c.l.b16 %v498
        %v517 = vunpack.c.h.b16 %v498
        %v518 = vunpack.c.l.b16 %v499
        %v519 = vunpack.c.h.b16 %v499
        %v520 = vunpack.c.l.b16 %v500
        %v521 = vunpack.c.h.b16 %v500
        %v522 = vunpack.c.l.b16 %v501
        %v523 = vunpack.c.h.b16 %v501
        %v524 = vunpack.c.l.b16 %v502
        %v525 = vunpack.c.h.b16 %v502
        %v526 = vunpack.c.l.b16 %v503
        %v527 = vunpack.c.h.b16 %v503
        %v528 = vunpack.c.l.b16 %v504
        %v529 = vunpack.c.h.b16 %v504
        %v530 = vpack.c.b16 %v518, %v514
        %v531 = vpack.c.b16 %v519, %v515
        %v532 = vpack.c.b16 %v520, %v516
        %v533 = vpack.c.b16 %v521, %v517
        %v534 = vpack.c.b16 %v526, %v522
        %v535 = vpack.c.b16 %v527, %v523
        %v536 = vpack.c.b16 %v528, %v524
        %v537 = vpack.c.b16 %v529, %v525
        %v547 = vperm.slane %v505, 0
        %v548 = vperm.slane %v505, 1
        %v549 = vperm.slane %v505, 2
        %v550 = vperm.slane %v505, 3
        %v556 = vsel %vm478, %v496, 0
        %558 = vmatpush.bf16.msra.mxu0 0
        %559 = vmatpush.bf16.msra.mxu0 0
        %560 = vmatpush.bf16.msra.mxu0 0
        %561 = vmatpush.bf16.msra.mxu0 0
        %562 = vmatpush.bf16.msra.mxu0 0
        %563 = vmatpush.bf16.msra.mxu0 0
        %564 = vmatpush.bf16.msra.mxu0 %v534
        %565 = vmatpush.bf16.msra.mxu0 %v530
        %566 = vmatmul.bf16.gmra.mxu0 %v556
        %v567 = vpop.f32.mrf.mxu0
        %v568 = vadd.f32 %v547, %v567
        %v569 = vpop.f32.mrf.mxu0
        %570 = vdwg.mxu0
        %571 = vmatpush.bf16.msra.mxu0 0
        %572 = vmatpush.bf16.msra.mxu0 0
        %573 = vmatpush.bf16.msra.mxu0 0
        %574 = vmatpush.bf16.msra.mxu0 0
        %575 = vmatpush.bf16.msra.mxu0 0
        %576 = vmatpush.bf16.msra.mxu0 0
        %577 = vmatpush.bf16.msra.mxu0 %v535
        %578 = vmatpush.bf16.msra.mxu0 %v531
        %579 = vmatmul.bf16.gmra.mxu0 %v556
        %v580 = vpop.f32.mrf.mxu0
        %v581 = vadd.f32 %v548, %v580
        %v582 = vpop.f32.mrf.mxu0
        %583 = vdwg.mxu0
        %584 = vmatpush.bf16.msra.mxu0 0
        %585 = vmatpush.bf16.msra.mxu0 0
        %586 = vmatpush.bf16.msra.mxu0 0
        %587 = vmatpush.bf16.msra.mxu0 0
        %588 = vmatpush.bf16.msra.mxu0 0
        %589 = vmatpush.bf16.msra.mxu0 0
        %590 = vmatpush.bf16.msra.mxu0 %v536
        %591 = vmatpush.bf16.msra.mxu0 %v532
        %592 = vmatmul.bf16.gmra.mxu0 %v556
        %v593 = vpop.f32.mrf.mxu0
        %v594 = vadd.f32 %v549, %v593
        %v595 = vpop.f32.mrf.mxu0
        %596 = vdwg.mxu0
        %597 = vmatpush.bf16.msra.mxu0 0
        %598 = vmatpush.bf16.msra.mxu0 0
        %599 = vmatpush.bf16.msra.mxu0 0
        %600 = vmatpush.bf16.msra.mxu0 0
        %601 = vmatpush.bf16.msra.mxu0 0
        %602 = vmatpush.bf16.msra.mxu0 0
        %603 = vmatpush.bf16.msra.mxu0 %v537
        %604 = vmatpush.bf16.msra.mxu0 %v533
        %605 = vmatmul.bf16.gmra.mxu0 %v556
        %v606 = vpop.f32.mrf.mxu0
        %v607 = vadd.f32 %v550, %v606
        %v608 = vpop.f32.mrf.mxu0
        %609 = vdwg.mxu0
        %v610 = vmax.f32 %v568, 0.0
        %v611 = vmax.f32 %v581, 0.0
        %v612 = vmax.f32 %v594, 0.0
        %v613 = vmax.f32 %v607, 0.0
        %v614 = vpack.c.bf16 %v610, %v610
        %v615 = vpack.c.bf16 %v611, %v611
        %v616 = vpack.c.bf16 %v612, %v612
        %v617 = vpack.c.bf16 %v613, %v613
        %v618 = vld [vmem:[%s5] sm:$0xf]
        %v619 = vld [vmem:[%s5 + $0x4] sm:$0xf]
        %v620 = vld [vmem:[%s5 + $0x8] sm:$0xf]
        %v621 = vld [vmem:[%s5 + $0xc] sm:$0xf]
        %v622 = vld [vmem:[%s5 + $0x10] sm:$0xf]
        %v623 = vld [vmem:[%s5 + $0x14] sm:$0xf]
        %v624 = vld [vmem:[%s5 + $0x18] sm:$0xf]
        %v625 = vld [vmem:[%s5 + $0x1c] sm:$0xf]
        %v626 = vld [vmem:[%s5 + $0x20] sm:$0xf]
        %v627 = vld [vmem:[%s5 + $0x24] sm:$0xf]
        %v628 = vld [vmem:[%s5 + $0x28] sm:$0xf]
        %v629 = vld [vmem:[%s5 + $0x2c] sm:$0xf]
        %v630 = vld [vmem:[%s5 + $0x30] sm:$0xf]
        %v631 = vld [vmem:[%s5 + $0x34] sm:$0xf]
        %v632 = vld [vmem:[%s5 + $0x38] sm:$0xf]
        %v633 = vld [vmem:[%s5 + $0x3c] sm:$0xf]
        %v634 = vld [vmem:[%s5 + $0x40] sm:$0xf]
        %v635 = vld [vmem:[%s5 + $0x44] sm:$0xf]
        %v636 = vld [vmem:[%s5 + $0x48] sm:$0xf]
        %v637 = vld [vmem:[%s5 + $0x4c] sm:$0xf]
        %v638 = vld [vmem:[%s5 + $0x50] sm:$0xf]
        %v639 = vld [vmem:[%s5 + $0x54] sm:$0xf]
        %v640 = vld [vmem:[%s5 + $0x58] sm:$0xf]
        %v641 = vld [vmem:[%s5 + $0x5c] sm:$0xf]
        %v642 = vld [vmem:[%s5 + $0x60] sm:$0xf]
        %v643 = vld [vmem:[%s5 + $0x64] sm:$0xf]
        %v644 = vld [vmem:[%s5 + $0x68] sm:$0xf]
        %v645 = vld [vmem:[%s5 + $0x6c] sm:$0xf]
        %v646 = vld [vmem:[%s5 + $0x70] sm:$0xf]
        %v647 = vld [vmem:[%s5 + $0x74] sm:$0xf]
        %v648 = vld [vmem:[%s5 + $0x78] sm:$0xf]
        %v649 = vld [vmem:[%s5 + $0x7c] sm:$0xf]
        %v650 = vld [vmem:[%s5 + $0x80] sm:$0xf]
        %v651 = vld [vmem:[%s5 + $0x84] sm:$0xf]
        %v652 = vld [vmem:[%s5 + $0x88] sm:$0xf]
        %v653 = vld [vmem:[%s5 + $0x8c] sm:$0xf]
        %v654 = vld [vmem:[%s5 + $0x90] sm:$0xf]
        %v655 = vld [vmem:[%s5 + $0x94] sm:$0xf]
        %v656 = vld [vmem:[%s5 + $0x98] sm:$0xf]
        %v657 = vld [vmem:[%s5 + $0x9c] sm:$0xf]
        %v658 = vld [vmem:[%s5 + $0xa0] sm:$0xf]
        %v659 = vld [vmem:[%s5 + $0xa4] sm:$0xf]
        %v660 = vld [vmem:[%s5 + $0xa8] sm:$0xf]
        %v661 = vld [vmem:[%s5 + $0xac] sm:$0xf]
        %v662 = vld [vmem:[%s5 + $0xb0] sm:$0xf]
        %v663 = vld [vmem:[%s5 + $0xb4] sm:$0xf]
        %v664 = vld [vmem:[%s5 + $0xb8] sm:$0xf]
        %v665 = vld [vmem:[%s5 + $0xbc] sm:$0xf]
        %v666 = vld [vmem:[%s5 + $0xc0] sm:$0xf]
        %v667 = vld [vmem:[%s5 + $0xc4] sm:$0xf]
        %v668 = vld [vmem:[%s5 + $0xc8] sm:$0xf]
        %v669 = vld [vmem:[%s5 + $0xcc] sm:$0xf]
        %v670 = vld [vmem:[%s5 + $0xd0] sm:$0xf]
        %v671 = vld [vmem:[%s5 + $0xd4] sm:$0xf]
        %v672 = vld [vmem:[%s5 + $0xd8] sm:$0xf]
        %v673 = vld [vmem:[%s5 + $0xdc] sm:$0xf]
        %v674 = vld [vmem:[%s5 + $0xe0] sm:$0xf]
        %v675 = vld [vmem:[%s5 + $0xe4] sm:$0xf]
        %v676 = vld [vmem:[%s5 + $0xe8] sm:$0xf]
        %v677 = vld [vmem:[%s5 + $0xec] sm:$0xf]
        %v678 = vld [vmem:[%s5 + $0xf0] sm:$0xf]
        %v679 = vld [vmem:[%s5 + $0xf4] sm:$0xf]
        %v680 = vld [vmem:[%s5 + $0xf8] sm:$0xf]
        %v681 = vld [vmem:[%s5 + $0xfc] sm:$0xf]
        %v682 = vld [vmem:[%s6] sm:$0x1]
        %v747 = vunpack.c.l.b16 %v618
        %v748 = vunpack.c.l.b16 %v619
        %v749 = vunpack.c.l.b16 %v620
        %v750 = vunpack.c.l.b16 %v621
        %v751 = vunpack.c.l.b16 %v622
        %v752 = vunpack.c.l.b16 %v623
        %v753 = vunpack.c.l.b16 %v624
        %v754 = vunpack.c.l.b16 %v625
        %v755 = vunpack.c.l.b16 %v626
        %v756 = vunpack.c.l.b16 %v627
        %v757 = vunpack.c.l.b16 %v628
        %v758 = vunpack.c.l.b16 %v629
        %v759 = vunpack.c.l.b16 %v630
        %v760 = vunpack.c.l.b16 %v631
        %v761 = vunpack.c.l.b16 %v632
        %v762 = vunpack.c.l.b16 %v633
        %v763 = vunpack.c.l.b16 %v634
        %v764 = vunpack.c.l.b16 %v635
        %v765 = vunpack.c.l.b16 %v636
        %v766 = vunpack.c.l.b16 %v637
        %v767 = vunpack.c.l.b16 %v638
        %v768 = vunpack.c.l.b16 %v639
        %v769 = vunpack.c.l.b16 %v640
        %v770 = vunpack.c.l.b16 %v641
        %v771 = vunpack.c.l.b16 %v642
        %v772 = vunpack.c.l.b16 %v643
        %v773 = vunpack.c.l.b16 %v644
        %v774 = vunpack.c.l.b16 %v645
        %v775 = vunpack.c.l.b16 %v646
        %v776 = vunpack.c.l.b16 %v647
        %v777 = vunpack.c.l.b16 %v648
        %v778 = vunpack.c.l.b16 %v649
        %v779 = vunpack.c.l.b16 %v650
        %v780 = vunpack.c.l.b16 %v651
        %v781 = vunpack.c.l.b16 %v652
        %v782 = vunpack.c.l.b16 %v653
        %v783 = vunpack.c.l.b16 %v654
        %v784 = vunpack.c.l.b16 %v655
        %v785 = vunpack.c.l.b16 %v656
        %v786 = vunpack.c.l.b16 %v657
        %v787 = vunpack.c.l.b16 %v658
        %v788 = vunpack.c.l.b16 %v659
        %v789 = vunpack.c.l.b16 %v660
        %v790 = vunpack.c.l.b16 %v661
        %v791 = vunpack.c.l.b16 %v662
        %v792 = vunpack.c.l.b16 %v663
        %v793 = vunpack.c.l.b16 %v664
        %v794 = vunpack.c.l.b16 %v665
        %v795 = vunpack.c.l.b16 %v666
        %v796 = vunpack.c.l.b16 %v667
        %v797 = vunpack.c.l.b16 %v668
        %v798 = vunpack.c.l.b16 %v669
        %v799 = vunpack.c.l.b16 %v670
        %v800 = vunpack.c.l.b16 %v671
        %v801 = vunpack.c.l.b16 %v672
        %v802 = vunpack.c.l.b16 %v673
        %v803 = vunpack.c.l.b16 %v674
        %v804 = vunpack.c.l.b16 %v675
        %v805 = vunpack.c.l.b16 %v676
        %v806 = vunpack.c.l.b16 %v677
        %v807 = vunpack.c.l.b16 %v678
        %v808 = vunpack.c.l.b16 %v679
        %v809 = vunpack.c.l.b16 %v680
        %v810 = vunpack.c.l.b16 %v681
        %v811 = vpack.c.b16 %v748, %v747
        %v812 = vpack.c.b16 %v750, %v749
        %v813 = vpack.c.b16 %v752, %v751
        %v814 = vpack.c.b16 %v754, %v753
        %v815 = vpack.c.b16 %v756, %v755
        %v816 = vpack.c.b16 %v758, %v757
        %v817 = vpack.c.b16 %v760, %v759
        %v818 = vpack.c.b16 %v762, %v761
        %v819 = vpack.c.b16 %v764, %v763
        %v820 = vpack.c.b16 %v766, %v765
        %v821 = vpack.c.b16 %v768, %v767
        %v822 = vpack.c.b16 %v770, %v769
        %v823 = vpack.c.b16 %v772, %v771
        %v824 = vpack.c.b16 %v774, %v773
        %v825 = vpack.c.b16 %v776, %v775
        %v826 = vpack.c.b16 %v778, %v777
        %v827 = vpack.c.b16 %v780, %v779
        %v828 = vpack.c.b16 %v782, %v781
        %v829 = vpack.c.b16 %v784, %v783
        %v830 = vpack.c.b16 %v786, %v785
        %v831 = vpack.c.b16 %v788, %v787
        %v832 = vpack.c.b16 %v790, %v789
        %v833 = vpack.c.b16 %v792, %v791
        %v834 = vpack.c.b16 %v794, %v793
        %v835 = vpack.c.b16 %v796, %v795
        %v836 = vpack.c.b16 %v798, %v797
        %v837 = vpack.c.b16 %v800, %v799
        %v838 = vpack.c.b16 %v802, %v801
        %v839 = vpack.c.b16 %v804, %v803
        %v840 = vpack.c.b16 %v806, %v805
        %v841 = vpack.c.b16 %v808, %v807
        %v842 = vpack.c.b16 %v810, %v809
        %875 = vmatpush.bf16.msra.mxu0 %v818
        %876 = vmatpush.bf16.msra.mxu0 %v817
        %877 = vmatpush.bf16.msra.mxu0 %v816
        %878 = vmatpush.bf16.msra.mxu0 %v815
        %879 = vmatpush.bf16.msra.mxu0 %v814
        %880 = vmatpush.bf16.msra.mxu0 %v813
        %881 = vmatpush.bf16.msra.mxu0 %v812
        %882 = vmatpush.bf16.msra.mxu0 %v811
        %883 = vmatmul.bf16.gmra.mxu0 %v614
        %v884 = vpop.f32.mrf.mxu0
        %v885 = vadd.f32 %v682, %v884
        %v886 = vpop.f32.mrf.mxu0
        %887 = vdwg.mxu0
        %888 = vmatpush.bf16.msra.mxu0 %v826
        %889 = vmatpush.bf16.msra.mxu0 %v825
        %890 = vmatpush.bf16.msra.mxu0 %v824
        %891 = vmatpush.bf16.msra.mxu0 %v823
        %892 = vmatpush.bf16.msra.mxu0 %v822
        %893 = vmatpush.bf16.msra.mxu0 %v821
        %894 = vmatpush.bf16.msra.mxu0 %v820
        %895 = vmatpush.bf16.msra.mxu0 %v819
        %896 = vmatmul.bf16.gmra.mxu0 %v615
        %v897 = vpop.f32.mrf.mxu0
        %v898 = vadd.f32 %v885, %v897
        %v899 = vpop.f32.mrf.mxu0
        %900 = vdwg.mxu0
        %901 = vmatpush.bf16.msra.mxu0 %v834
        %902 = vmatpush.bf16.msra.mxu0 %v833
        %903 = vmatpush.bf16.msra.mxu0 %v832
        %904 = vmatpush.bf16.msra.mxu0 %v831
        %905 = vmatpush.bf16.msra.mxu0 %v830
        %906 = vmatpush.bf16.msra.mxu0 %v829
        %907 = vmatpush.bf16.msra.mxu0 %v828
        %908 = vmatpush.bf16.msra.mxu0 %v827
        %909 = vmatmul.bf16.gmra.mxu0 %v616
        %v910 = vpop.f32.mrf.mxu0
        %v911 = vadd.f32 %v898, %v910
        %v912 = vpop.f32.mrf.mxu0
        %913 = vdwg.mxu0
        %914 = vmatpush.bf16.msra.mxu0 %v842
        %915 = vmatpush.bf16.msra.mxu0 %v841
        %916 = vmatpush.bf16.msra.mxu0 %v840
        %917 = vmatpush.bf16.msra.mxu0 %v839
        %918 = vmatpush.bf16.msra.mxu0 %v838
        %919 = vmatpush.bf16.msra.mxu0 %v837
        %920 = vmatpush.bf16.msra.mxu0 %v836
        %921 = vmatpush.bf16.msra.mxu0 %v835
        %922 = vmatmul.bf16.gmra.mxu0 %v617
        %v923 = vpop.f32.mrf.mxu0
        %v924 = vadd.f32 %v911, %v923
        %v925 = vpop.f32.mrf.mxu0
        %926 = vdwg.mxu0
        %927 = vst [vmem:[%s270] sm:$0x1] %v924
        %s928 = sand.u32 %s181, 1
        %s929 = scalar_lea.sflag [#allocation3], %s928
        %s930 = sand.u32 %s181, 1
        %s931 = scalar_lea.vmem [#allocation2], %s930
        // Predicated region
        $region49: #{cnn_forward.3} parent=47 // pred_check
          %p932 = pneg %p191
        $region50: #{cnn_forward.3} parent=47 // pred_check_branch
          %934 = sbr.rel (%p932) target = $region52
        $region51: #{cnn_forward.3} parent=47 // pred_region
          %936 = vsyncadd %s929, 0
          %s937 = scalar_lea.hbm %s7, %s21
          %s939 = sshll.u32 %s931, 4
          %s940 = int_to_ptr.vmem [resolvable:$true] %s939
          %s941 = sshll.u32 %s937, 4
          %s942 = int_to_ptr.hbm [resolvable:$true] %s941
          %944 = dma.vmem_to_hbm [thread:$0]  %s940, 16, %s942, %s929
        $region52: #{cnn_forward.3} parent=47 // pred_fallthru
          _
      $region48: #{cnn_forward.3} parent=5 // pred_fallthru
        _
      %p945 = scmp.le.s32.totalorder 2, %s16
      // Predicated region
      $region53: #{cnn_forward.3} parent=5 // pred_check
        %p946 = pneg %p945
      $region54: #{cnn_forward.3} parent=5 // pred_check_branch
        %948 = sbr.rel (%p946) target = $region56
      $region55: #{cnn_forward.3} parent=5 // pred_region
        %s949 = ssub.s32 %s16, 2
        // Predicated region
        $region57: #{cnn_forward.3} parent=55 // pred_check
          %p950 = pneg %p197
        $region58: #{cnn_forward.3} parent=55 // pred_check_branch
          %952 = sbr.rel (%p950) target = $region60
        $region59: #{cnn_forward.3} parent=55 // pred_region
          %s953 = sand.u32 %s182, 1
          %s954 = scalar_lea.sflag [#allocation3], %s953
          %s955 = sand.u32 %s182, 1
          %s956 = scalar_lea.vmem [#allocation2], %s955
          %958 = dma.done %s954, 16
        $region60: #{cnn_forward.3} parent=55 // pred_fallthru
          _
      $region56: #{cnn_forward.3} parent=5 // pred_fallthru
        _
    $region6: #{cnn_forward.3} parent=1 // loop_footer
      %s20 = sadd.s32 1, %s16
    $region7: #{cnn_forward.3} parent=1 // loop_footer_branch
      %15 = sbr.rel target = $region3
    $region8: #{cnn_forward.3} parent=1 // loop_exit
      _
    %959 = vsyncpa [#allocation3], 1
    %s960 = scalar_lea.sflag [#allocation3], 1
    %961 = vsyncpa %s960, 1

</llo_original>
